<compile_context>
chip_gen: v5e
topology: v5e:2x2
jax: 0.10.0
libtpu: 0.0.40
codegen_flags: <defaults>
</compile_context>

<pallas_src>
import functools

import jax
import jax.numpy as jnp
from jax import lax
from jax.experimental import pallas as pl
from jax.experimental.pallas import tpu as pltpu

BN_EPS = 1e-5
VMEM_LIMIT = 32 * 1024 * 1024


def _round_up(n, m):
    return ((n + m - 1) // m) * m


def _pick_tile(n, cap=512):
    """Largest divisor of n that is <= cap and sublane-friendly (mult of 8), else n."""
    if n <= cap:
        return n
    for d in range(cap, 7, -1):
        if n % d == 0 and d % 8 == 0:
            return d
    return n


def _fold_bn(gamma, beta, mean, var):
    scale = gamma / jnp.sqrt(var + BN_EPS)
    return scale, beta - mean * scale


# ---------------------------------------------------------------------------
# Pallas kernels
# ---------------------------------------------------------------------------

def _matmul_affine_kernel(x_ref, w_ref, scale_ref, bias_ref, o_ref, *, in_relu, activation):
    """o = act((relu?(x) @ w) * scale + bias); x/w bf16, epilogue f32."""
    x = x_ref[...]
    if in_relu:
        x = jnp.maximum(x, 0)
    acc = jnp.dot(x, w_ref[...], preferred_element_type=jnp.float32)
    y = acc * scale_ref[...] + bias_ref[...]
    if activation == "relu":
        y = jnp.maximum(y, 0.0)
    o_ref[...] = y.astype(o_ref.dtype)


def matmul_affine(x, w, scale, bias, *, in_relu=False, activation=None,
                  out_dtype=jnp.bfloat16, block_m=256):
    """x:(M,K) @ w:(K,N) in bf16, per-column f32 scale/bias, optional relus."""
    M, K = x.shape
    Kw, N = w.shape
    assert K == Kw, (K, Kw)
    x = x.astype(jnp.bfloat16)
    w = w.astype(jnp.bfloat16)
    scale = scale.reshape(1, N).astype(jnp.float32)
    bias = bias.reshape(1, N).astype(jnp.float32)

    bm = min(block_m, _round_up(M, 8))
    m_pad = _round_up(M, bm)
    if m_pad != M:
        x = jnp.pad(x, ((0, m_pad - M), (0, 0)))

    kernel = functools.partial(_matmul_affine_kernel, in_relu=in_relu, activation=activation)
    out = pl.pallas_call(
        kernel,
        out_shape=jax.ShapeDtypeStruct((m_pad, N), out_dtype),
        grid_spec=pltpu.PrefetchScalarGridSpec(
            num_scalar_prefetch=0,
            grid=(m_pad // bm,),
            in_specs=[
                pl.BlockSpec((bm, K), lambda i: (i, 0)),
                pl.BlockSpec((K, N), lambda i: (0, 0)),
                pl.BlockSpec((1, N), lambda i: (0, 0)),
                pl.BlockSpec((1, N), lambda i: (0, 0)),
            ],
            out_specs=pl.BlockSpec((bm, N), lambda i: (i, 0)),
        ),
        compiler_params=pltpu.CompilerParams(
            dimension_semantics=("parallel",), vmem_limit_bytes=VMEM_LIMIT),
    )(x, w, scale, bias)
    return out[:M] if m_pad != M else out


def _conv_pool_kernel(x_ref, w_ref, scale_ref, bias_ref, z_ref, pool_ref):
    """conv2-as-matmul with fused BN and fused global-average-pool accumulation."""
    t = pl.program_id(1)

    @pl.when(t == 0)
    def _():
        pool_ref[...] = jnp.zeros_like(pool_ref)

    acc = jnp.dot(x_ref[...], w_ref[...], preferred_element_type=jnp.float32)
    y = acc * scale_ref[...] + bias_ref[...]
    z_ref[...] = y.astype(z_ref.dtype)
    pool_ref[...] += jnp.sum(y, axis=0, keepdims=True)


def conv2_pool(patches, w, scale, bias, *, max_tile=512):
    """patches:(B,HW,K) bf16 -> z:(B,HW,C) bf16 and per-batch column sums (B,1,C) f32."""
    B, HW, K = patches.shape
    Kw, C = w.shape
    assert K == Kw, (K, Kw)
    thw = _pick_tile(HW, max_tile)
    n_t = HW // thw
    z, pool = pl.pallas_call(
        _conv_pool_kernel,
        out_shape=(jax.ShapeDtypeStruct((B, HW, C), jnp.bfloat16),
                   jax.ShapeDtypeStruct((B, 1, C), jnp.float32)),
        grid_spec=pltpu.PrefetchScalarGridSpec(
            num_scalar_prefetch=0,
            grid=(B, n_t),
            in_specs=[
                pl.BlockSpec((None, thw, K), lambda b, t: (b, t, 0)),
                pl.BlockSpec((K, C), lambda b, t: (0, 0)),
                pl.BlockSpec((1, C), lambda b, t: (0, 0)),
                pl.BlockSpec((1, C), lambda b, t: (0, 0)),
            ],
            out_specs=[
                pl.BlockSpec((None, thw, C), lambda b, t: (b, t, 0)),
                pl.BlockSpec((None, 1, C), lambda b, t: (b, 0, 0)),
            ],
        ),
        compiler_params=pltpu.CompilerParams(
            dimension_semantics=("parallel", "arbitrary"),
            vmem_limit_bytes=VMEM_LIMIT),
    )(patches.astype(jnp.bfloat16), w.astype(jnp.bfloat16),
      scale.reshape(1, C).astype(jnp.float32), bias.reshape(1, C).astype(jnp.float32))
    return z, pool


def _se_kernel(pool_ref, w1_ref, b1_ref, w2_ref, b2_ref, g_ref, *, inv_hw):
    """SE MLP fused: gate = sigmoid(relu(mean @ W1 + b1) @ W2 + b2)."""
    p = pool_ref[...] * inv_hw
    h = jnp.dot(p, w1_ref[...], preferred_element_type=jnp.float32) + b1_ref[...]
    h = jnp.maximum(h, 0.0)
    g = jnp.dot(h, w2_ref[...], preferred_element_type=jnp.float32) + b2_ref[...]
    g_ref[...] = jax.nn.sigmoid(g)


def se_gate(pool_sum, w1, b1, w2, b2, *, hw):
    """pool_sum:(B,C) f32 (unnormalized sums) -> SE gate (B,C) f32."""
    B, C = pool_sum.shape
    mid = w1.shape[1]
    kernel = functools.partial(_se_kernel, inv_hw=1.0 / float(hw))
    return pl.pallas_call(
        kernel,
        out_shape=jax.ShapeDtypeStruct((B, C), jnp.float32),
        grid_spec=pltpu.PrefetchScalarGridSpec(
            num_scalar_prefetch=0,
            grid=(1,),
            in_specs=[
                pl.BlockSpec((B, C), lambda i: (0, 0)),
                pl.BlockSpec((C, mid), lambda i: (0, 0)),
                pl.BlockSpec((1, mid), lambda i: (0, 0)),
                pl.BlockSpec((mid, C), lambda i: (0, 0)),
                pl.BlockSpec((1, C), lambda i: (0, 0)),
            ],
            out_specs=pl.BlockSpec((B, C), lambda i: (0, 0)),
        ),
        compiler_params=pltpu.CompilerParams(vmem_limit_bytes=VMEM_LIMIT),
    )(pool_sum, w1, b1, w2, b2)


def _combine_kernel(s_ref, z1_ref, z2_ref, g1_ref, g2_ref, o_ref):
    """SE gating of both branches + eval-mode shake (alpha=0.5) + shortcut add."""
    s = s_ref[...].astype(jnp.float32)
    x1 = z1_ref[...].astype(jnp.float32) * g1_ref[...]
    x2 = z2_ref[...].astype(jnp.float32) * g2_ref[...]
    o_ref[...] = (s + 0.5 * (x1 + x2)).astype(o_ref.dtype)


def combine(shortcut, z1, z2, g1, g2):
    """shortcut/z1/z2: (B,HW,C); g1/g2: (B,1,C). Tiled over (B, HW)."""
    B, HW, C = z1.shape
    thw = _pick_tile(HW)
    big = pl.BlockSpec((None, thw, C), lambda b, t: (b, t, 0))
    gate = pl.BlockSpec((None, 1, C), lambda b, t: (b, 0, 0))
    return pl.pallas_call(
        _combine_kernel,
        out_shape=jax.ShapeDtypeStruct((B, HW, C), jnp.float32),
        grid_spec=pltpu.PrefetchScalarGridSpec(
            num_scalar_prefetch=0,
            grid=(B, HW // thw),
            in_specs=[big, big, big, gate, gate],
            out_specs=big,
        ),
        compiler_params=pltpu.CompilerParams(
            dimension_semantics=("parallel", "parallel"),
            vmem_limit_bytes=VMEM_LIMIT),
    )(shortcut, z1, z2, g1, g2)


# ---------------------------------------------------------------------------
# Wrapper (layout plumbing in plain JAX, compute in the Pallas kernels above)
# ---------------------------------------------------------------------------

def _im2col3x3(x_nhwc, stride):
    """3x3 / pad-1 patch extraction. Returns ((B, Ho, Wo, 9*C), (Ho, Wo))."""
    B, H, W, C = x_nhwc.shape
    Ho = (H + 2 - 3) // stride + 1
    Wo = (W + 2 - 3) // stride + 1
    xp = jnp.pad(x_nhwc, ((0, 0), (1, 1), (1, 1), (0, 0)))
    cols = []
    for dy in range(3):
        for dx in range(3):
            cols.append(lax.slice(
                xp,
                (0, dy, dx, 0),
                (B, dy + (Ho - 1) * stride + 1, dx + (Wo - 1) * stride + 1, C),
                (1, stride, stride, 1)))
    patches = jnp.concatenate(cols, axis=-1)            # (B, Ho, Wo, 9*C)
    return patches, (Ho, Wo)


def _conv3x3_w_to_mat(w):
    # torch OIHW (Cout, Cin, 3, 3) -> (9*Cin, Cout), matching the im2col ordering.
    co, ci = w.shape[0], w.shape[1]
    return jnp.transpose(w, (2, 3, 1, 0)).reshape(9 * ci, co)


def prepare_params(params):
    """One-time (eager) weight re-layout + BN folding + bf16 casts."""
    def prep_path(p):
        c = p["w2"].shape[0]
        mid = p["fc1_w"].shape[0]
        s2, b2 = _fold_bn(*p["bn2"])
        return dict(
            conv2_w=_conv3x3_w_to_mat(p["w2"]).astype(jnp.bfloat16),
            conv2_scale=s2.reshape(1, c).astype(jnp.float32),
            conv2_bias=b2.reshape(1, c).astype(jnp.float32),
            fc1_w=p["fc1_w"].T.astype(jnp.float32),                 # (C, mid)
            fc1_b=p["fc1_b"].reshape(1, mid).astype(jnp.float32),
            fc2_w=p["fc2_w"].T.astype(jnp.float32),                 # (mid, C)
            fc2_b=p["fc2_b"].reshape(1, c).astype(jnp.float32),
        )

    p1, p2 = params["path1"], params["path2"]
    cout = p1["w1"].shape[0]
    s1a, b1a = _fold_bn(*p1["bn1"])
    s1b, b1b = _fold_bn(*p2["bn1"])
    prep = dict(
        # conv1 of both paths fused along N (they share the relu(x) patches).
        conv1_w=jnp.concatenate(
            [_conv3x3_w_to_mat(p1["w1"]), _conv3x3_w_to_mat(p2["w1"])],
            axis=1).astype(jnp.bfloat16),                           # (9*Cin, 2*Cout)
        conv1_scale=jnp.concatenate([s1a, s1b]).reshape(1, 2 * cout).astype(jnp.float32),
        conv1_bias=jnp.concatenate([b1a, b1b]).reshape(1, 2 * cout).astype(jnp.float32),
        paths=(prep_path(p1), prep_path(p2)),
    )
    if "skip" in params:
        sk = params["skip"]
        half = sk["w1"].shape[0]
        s, b = _fold_bn(*sk["bn"])
        prep["skip"] = dict(
            w1=sk["w1"][:, :, 0, 0].T.astype(jnp.bfloat16),         # (Cin, half)
            w2=sk["w2"][:, :, 0, 0].T.astype(jnp.bfloat16),
            scale1=s[:half].reshape(1, half).astype(jnp.float32),
            bias1=b[:half].reshape(1, half).astype(jnp.float32),
            scale2=s[half:].reshape(1, half).astype(jnp.float32),
            bias2=b[half:].reshape(1, half).astype(jnp.float32),
        )
    return prep


def _skip_connection(x_nhwc, sp, stride):
    """relu -> {subsample, shift+pad+subsample} -> 1x1 convs -> concat -> BN."""
    B, H, W, Cin = x_nhwc.shape
    half = sp["w1"].shape[1]
    sub1 = x_nhwc[:, ::stride, ::stride, :]
    shifted = jnp.pad(x_nhwc[:, 1:, 1:, :], ((0, 0), (0, 1), (0, 1), (0, 0)))
    sub2 = shifted[:, ::stride, ::stride, :]
    Ho, Wo = sub1.shape[1], sub1.shape[2]
    M = B * Ho * Wo

    y1 = matmul_affine(sub1.reshape(M, Cin), sp["w1"], sp["scale1"], sp["bias1"],
                       in_relu=True, activation=None, out_dtype=jnp.bfloat16)
    y2 = matmul_affine(sub2.reshape(M, Cin), sp["w2"], sp["scale2"], sp["bias2"],
                       in_relu=True, activation=None, out_dtype=jnp.bfloat16)
    # TODO(synk): write y1/y2 into disjoint column halves of one kernel output to
    # avoid this concat materialization (stride-2 path, small tensor).
    z = jnp.concatenate([y1, y2], axis=-1)
    return z.reshape(B, Ho * Wo, 2 * half)


@functools.partial(jax.jit, static_argnames=("stride",))
def basic_block_forward(x_nchw, prep, *, stride):
    """Eval-mode forward of BasicBlock (shake alpha = beta = 0.5, running-stat BN)."""
    # TODO(synk): training-mode behavior (batch-stat BatchNorm, random shake-shake
    # alpha/beta) is not implemented; this is the inference path of the module.
    x = jnp.transpose(x_nchw, (0, 2, 3, 1)).astype(jnp.bfloat16)    # NHWC, bf16
    B, H, W, Cin = x.shape
    c2 = prep["conv1_w"].shape[1]
    Cout = c2 // 2

    # Fused conv1 of both paths (+ folded BN + relu) from shared relu(x) patches.
    patches, (Ho, Wo) = _im2col3x3(x, stride)
    M = B * Ho * Wo
    HW = Ho * Wo
    h = matmul_affine(patches.reshape(M, 9 * Cin), prep["conv1_w"],
                      prep["conv1_scale"], prep["conv1_bias"],
                      in_relu=True, activation="relu", out_dtype=jnp.bfloat16)
    h = h.reshape(B, Ho, Wo, c2)

    zs, gs = [], []
    for idx, pp in enumerate(prep["paths"]):
        hp = lax.slice_in_dim(h, idx * Cout, (idx + 1) * Cout, axis=3)
        p2, _ = _im2col3x3(hp, 1)                                    # (B, Ho, Wo, 9*Cout)
        z, pool = conv2_pool(p2.reshape(B, HW, 9 * Cout),
                             pp["conv2_w"], pp["conv2_scale"], pp["conv2_bias"])
        gate = se_gate(pool.reshape(B, Cout), pp["fc1_w"], pp["fc1_b"],
                       pp["fc2_w"], pp["fc2_b"], hw=HW)
        zs.append(z)
        gs.append(gate.reshape(B, 1, Cout))

    if "skip" in prep:
        shortcut = _skip_connection(x, prep["skip"], stride)         # (B, HW, Cout) bf16
    else:
        shortcut = x.reshape(B, H * W, Cin)                          # identity (Cin == Cout)

    out = combine(shortcut, zs[0], zs[1], gs[0], gs[1])              # (B, HW, Cout) f32
    # TODO(synk): fold this NHWC->NCHW relayout into the combine kernel's out_spec
    # (in-kernel transpose) to save one HBM pass over the output.
    return jnp.transpose(out.reshape(B, Ho, Wo, Cout), (0, 3, 1, 2))


# ---------------------------------------------------------------------------
# Pure-JAX reference (mirrors the PyTorch module in eval mode, f32)
# ---------------------------------------------------------------------------

_PREC = lax.Precision.HIGHEST


def _conv2d_nchw(x, w, stride, padding):
    return lax.conv_general_dilated(
        x, w, (stride, stride), ((padding, padding), (padding, padding)),
        dimension_numbers=("NCHW", "OIHW", "NCHW"), precision=_PREC)


def _bn_ref(x, gamma, beta, mean, var):
    scale = gamma / jnp.sqrt(var + BN_EPS)
    shift = beta - mean * scale
    return x * scale[None, :, None, None] + shift[None, :, None, None]


def _residual_path_ref(x, p, stride):
    x = jax.nn.relu(x)
    x = jax.nn.relu(_bn_ref(_conv2d_nchw(x, p["w1"], stride, 1), *p["bn1"]))
    x = _bn_ref(_conv2d_nchw(x, p["w2"], 1, 1), *p["bn2"])
    y = jnp.mean(x, axis=(2, 3))
    y = jax.nn.relu(jnp.dot(y, p["fc1_w"].T, precision=_PREC) + p["fc1_b"])
    y = jax.nn.sigmoid(jnp.dot(y, p["fc2_w"].T, precision=_PREC) + p["fc2_b"])
    return x * y[:, :, None, None]


def _skip_ref(x, p, stride):
    x = jax.nn.relu(x)
    y1 = _conv2d_nchw(x[:, :, ::stride, ::stride], p["w1"], 1, 0)
    y2 = jnp.pad(x[:, :, 1:, 1:], ((0, 0), (0, 0), (0, 1), (0, 1)))
    y2 = _conv2d_nchw(y2[:, :, ::stride, ::stride], p["w2"], 1, 0)
    z = jnp.concatenate([y1, y2], axis=1)
    return _bn_ref(z, *p["bn"])


def basic_block_ref(x, params, stride):
    x1 = _residual_path_ref(x, params["path1"], stride)
    x2 = _residual_path_ref(x, params["path2"], stride)
    y = 0.5 * x1 + 0.5 * x2                       # eval-mode shake
    s = _skip_ref(x, params["skip"], stride) if "skip" in params else x
    return s + y


# ---------------------------------------------------------------------------
# Parameter construction + self-test
# ---------------------------------------------------------------------------

def make_params(key, in_ch, out_ch, with_skip):
    keys = iter(jax.random.split(key, 64))

    def conv3(ci, co):
        return jax.random.normal(next(keys), (co, ci, 3, 3), jnp.float32) * (2.0 / (ci * 9)) ** 0.5

    def conv1(ci, co):
        return jax.random.normal(next(keys), (co, ci, 1, 1), jnp.float32) * (2.0 / ci) ** 0.5

    def bn(c):
        gamma = jax.random.uniform(next(keys), (c,), jnp.float32, 0.5, 1.5)
        beta = jax.random.normal(next(keys), (c,), jnp.float32) * 0.1
        mean = jax.random.normal(next(keys), (c,), jnp.float32) * 0.1
        var = jax.random.uniform(next(keys), (c,), jnp.float32, 0.5, 1.5)
        return (gamma, beta, mean, var)

    def path():
        mid = out_ch // 4     # se_reduction = 4
        return dict(
            w1=conv3(in_ch, out_ch), bn1=bn(out_ch),
            w2=conv3(out_ch, out_ch), bn2=bn(out_ch),
            fc1_w=jax.random.normal(next(keys), (mid, out_ch), jnp.float32) * (1.0 / out_ch) ** 0.5,
            fc1_b=jax.random.normal(next(keys), (mid,), jnp.float32) * 0.1,
            fc2_w=jax.random.normal(next(keys), (out_ch, mid), jnp.float32) * (1.0 / mid) ** 0.5,
            fc2_b=jax.random.normal(next(keys), (out_ch,), jnp.float32) * 0.1,
        )

    params = dict(path1=path(), path2=path())
    if with_skip:
        params["skip"] = dict(w1=conv1(in_ch, out_ch // 2),
                              w2=conv1(in_ch, out_ch // 2),
                              bn=bn(out_ch))
    return params


if __name__ == "__main__":
    key = jax.random.PRNGKey(0)
    k_x1, k_x2, k_p1, k_p2 = jax.random.split(key, 4)

    # Case 1: channel expansion + stride 2 -> SkipConnection shortcut.
    B, Cin, H, W, Cout, stride = 2, 4, 16, 16, 8, 2
    x = jax.random.normal(k_x1, (B, Cin, H, W), jnp.float32)
    params = make_params(k_p1, Cin, Cout, with_skip=True)
    prep = prepare_params(params)                         # eager, one-time weight prep
    y = basic_block_forward(x, prep, stride=stride)
    jax.block_until_ready(y)
    y_ref = basic_block_ref(x, params, stride)
    assert y.shape == (B, Cout, H // stride, W // stride), y.shape
    err1 = float(jnp.max(jnp.abs(y - y_ref)))
    mean1 = float(jnp.mean(jnp.abs(y - y_ref)))
    # bf16 MXU operands vs f32 HIGHEST reference -> tolerance is accordingly looser.
    assert err1 < 0.15 and mean1 < 0.05, f"case1 err max={err1} mean={mean1}"

    # Case 2: identity shortcut (in_channels == out_channels, stride 1).
    x2 = jax.random.normal(k_x2, (B, Cout, H, W), jnp.float32)
    params2 = make_params(k_p2, Cout, Cout, with_skip=False)
    prep2 = prepare_params(params2)
    y2 = basic_block_forward(x2, prep2, stride=1)
    jax.block_until_ready(y2)
    y2_ref = basic_block_ref(x2, params2, 1)
    assert y2.shape == (B, Cout, H, W), y2.shape
    err2 = float(jnp.max(jnp.abs(y2 - y2_ref)))
    mean2 = float(jnp.mean(jnp.abs(y2 - y2_ref)))
    assert err2 < 0.15 and mean2 < 0.05, f"case2 err max={err2} mean={mean2}"

    print("KERNEL_OK")
</pallas_src>

<mosaic_0001>
module attributes {stable_mosaic.version = 11 : i64} {
  func.func @_matmul_affine_kernel(%arg0: i32, %arg1: memref<128x36xbf16, #tpu.memory_space<vmem>>, %arg2: memref<36x16xbf16, #tpu.memory_space<vmem>>, %arg3: memref<1x16xf32, #tpu.memory_space<vmem>>, %arg4: memref<1x16xf32, #tpu.memory_space<vmem>>, %arg5: memref<128x16xbf16, #tpu.memory_space<vmem>>) attributes {dimension_semantics = [#tpu.dimension_semantics<parallel>], iteration_bounds = array<i64: 1>, scalar_prefetch = 0 : i64, scratch_operands = 0 : i64, tpu.core_type = #tpu.core_type<tc>, window_params = [{transform_indices = @transform_0, window_bounds = array<i64: 128, 36>}, {pipeline_mode = #tpu.pipeline_mode<synchronous>, transform_indices = @transform_1, window_bounds = array<i64: 36, 16>}, {pipeline_mode = #tpu.pipeline_mode<synchronous>, transform_indices = @transform_2, window_bounds = array<i64: 1, 16>}, {pipeline_mode = #tpu.pipeline_mode<synchronous>, transform_indices = @transform_3, window_bounds = array<i64: 1, 16>}, {transform_indices = @transform_4, window_bounds = array<i64: 128, 16>}]} {
    %c0 = arith.constant 0 : index
    %c0_0 = arith.constant 0 : index
    %0 = vector.load %arg1[%c0, %c0_0] : memref<128x36xbf16, #tpu.memory_space<vmem>>, vector<128x36xbf16>
    %cst = arith.constant 0.000000e+00 : bf16
    %1 = vector.broadcast %cst : bf16 to vector<128x36xbf16>
    %2 = arith.maximumf %0, %1 : vector<128x36xbf16>
    %c0_1 = arith.constant 0 : index
    %c0_2 = arith.constant 0 : index
    %3 = vector.load %arg2[%c0_1, %c0_2] : memref<36x16xbf16, #tpu.memory_space<vmem>>, vector<36x16xbf16>
    %cst_3 = arith.constant dense<0.000000e+00> : vector<128x16xf32>
    %4 = tpu.matmul %2, %3, %cst_3 {dimension_numbers = #tpu.dot_dimension_numbers<[1], [0], [0], [1], [0, 0, 1, 1], [], []>} : vector<128x36xbf16>, vector<36x16xbf16>, vector<128x16xf32> -> vector<128x16xf32>
    %c0_4 = arith.constant 0 : index
    %c0_5 = arith.constant 0 : index
    %5 = vector.load %arg3[%c0_4, %c0_5] : memref<1x16xf32, #tpu.memory_space<vmem>>, vector<1x16xf32>
    %6 = vector.broadcast %5 : vector<1x16xf32> to vector<128x16xf32>
    %7 = arith.mulf %4, %6 : vector<128x16xf32>
    %c0_6 = arith.constant 0 : index
    %c0_7 = arith.constant 0 : index
    %8 = vector.load %arg4[%c0_6, %c0_7] : memref<1x16xf32, #tpu.memory_space<vmem>>, vector<1x16xf32>
    %9 = vector.broadcast %8 : vector<1x16xf32> to vector<128x16xf32>
    %10 = arith.addf %7, %9 : vector<128x16xf32>
    %cst_8 = arith.constant 0.000000e+00 : f32
    %11 = vector.broadcast %cst_8 : f32 to vector<128x16xf32>
    %12 = arith.maximumf %10, %11 : vector<128x16xf32>
    %13 = arith.truncf %12 : vector<128x16xf32> to vector<128x16xbf16>
    %c0_9 = arith.constant 0 : index
    %c0_10 = arith.constant 0 : index
    %14 = vector.load %arg5[%c0_9, %c0_10] : memref<128x16xbf16, #tpu.memory_space<vmem>>, vector<128x16xbf16>
    tpu.vector_store %arg5[%c0_9, %c0_10], %13 {strides = array<i32>} : memref<128x16xbf16, #tpu.memory_space<vmem>>, vector<128x16xbf16>,
    return
  }
  func.func @transform_0(%arg0: i32) -> (i32, i32) {
    %c0_i32 = arith.constant 0 : i32
    %c0_i32_0 = arith.constant 0 : i32
    return %arg0, %c0_i32 : i32, i32
  }
  func.func @transform_1(%arg0: i32) -> (i32, i32) {
    %c0_i32 = arith.constant 0 : i32
    %c0_i32_0 = arith.constant 0 : i32
    %c0_i32_1 = arith.constant 0 : i32
    return %c0_i32, %c0_i32_0 : i32, i32
  }
  func.func @transform_2(%arg0: i32) -> (i32, i32) {
    %c0_i32 = arith.constant 0 : i32
    %c0_i32_0 = arith.constant 0 : i32
    %c0_i32_1 = arith.constant 0 : i32
    return %c0_i32, %c0_i32_0 : i32, i32
  }
  func.func @transform_3(%arg0: i32) -> (i32, i32) {
    %c0_i32 = arith.constant 0 : i32
    %c0_i32_0 = arith.constant 0 : i32
    %c0_i32_1 = arith.constant 0 : i32
    return %c0_i32, %c0_i32_0 : i32, i32
  }
  func.func @transform_4(%arg0: i32) -> (i32, i32) {
    %c0_i32 = arith.constant 0 : i32
    %c0_i32_0 = arith.constant 0 : i32
    return %arg0, %c0_i32 : i32, i32
  }
}

module attributes {stable_mosaic.version = 11 : i64} {
  func.func @_conv_pool_kernel(%arg0: i32, %arg1: i32, %arg2: memref<1x64x72xbf16, #tpu.memory_space<vmem>>, %arg3: memref<72x8xbf16, #tpu.memory_space<vmem>>, %arg4: memref<1x8xf32, #tpu.memory_space<vmem>>, %arg5: memref<1x8xf32, #tpu.memory_space<vmem>>, %arg6: memref<1x64x8xbf16, #tpu.memory_space<vmem>>, %arg7: memref<1x1x8xf32, #tpu.memory_space<vmem>>) attributes {dimension_semantics = [#tpu.dimension_semantics<parallel>, #tpu.dimension_semantics<arbitrary>], iteration_bounds = array<i64: 2, 1>, scalar_prefetch = 0 : i64, scratch_operands = 0 : i64, tpu.core_type = #tpu.core_type<tc>, window_params = [{transform_indices = @transform_0, window_bounds = array<i64: 1, 64, 72>}, {pipeline_mode = #tpu.pipeline_mode<synchronous>, transform_indices = @transform_1, window_bounds = array<i64: 72, 8>}, {pipeline_mode = #tpu.pipeline_mode<synchronous>, transform_indices = @transform_2, window_bounds = array<i64: 1, 8>}, {pipeline_mode = #tpu.pipeline_mode<synchronous>, transform_indices = @transform_3, window_bounds = array<i64: 1, 8>}, {transform_indices = @transform_4, window_bounds = array<i64: 1, 64, 8>}, {transform_indices = @transform_5, window_bounds = array<i64: 1, 1, 8>}]} {
    %c0_i32 = arith.constant 0 : i32
    %0 = arith.cmpi eq, %arg1, %c0_i32 : i32
    %1 = arith.extui %0 : i1 to i32
    %c0_i32_0 = arith.constant 0 : i32
    %2 = arith.cmpi ne, %1, %c0_i32_0 : i32
    scf.if %2 {
      %cst_19 = arith.constant 0.000000e+00 : f32
      %25 = vector.broadcast %cst_19 : f32 to vector<1x8xf32>
      %c0_20 = arith.constant 0 : index
      %c0_21 = arith.constant 0 : index
      %c0_22 = arith.constant 0 : index
      %26 = vector.load %arg7[%c0_20, %c0_21, %c0_22] : memref<1x1x8xf32, #tpu.memory_space<vmem>>, vector<1x1x8xf32>
      %27 = vector.shape_cast %26 : vector<1x1x8xf32> to vector<1x8xf32>
      %28 = vector.shape_cast %25 : vector<1x8xf32> to vector<1x1x8xf32>
      tpu.vector_store %arg7[%c0_20, %c0_21, %c0_22], %28 {strides = array<i32>} : memref<1x1x8xf32, #tpu.memory_space<vmem>>, vector<1x1x8xf32>,
    } else {
    }
    %c0 = arith.constant 0 : index
    %c0_1 = arith.constant 0 : index
    %c0_2 = arith.constant 0 : index
    %3 = vector.load %arg2[%c0, %c0_1, %c0_2] : memref<1x64x72xbf16, #tpu.memory_space<vmem>>, vector<1x64x72xbf16>
    %4 = vector.shape_cast %3 : vector<1x64x72xbf16> to vector<64x72xbf16>
    %c0_3 = arith.constant 0 : index
    %c0_4 = arith.constant 0 : index
    %5 = vector.load %arg3[%c0_3, %c0_4] : memref<72x8xbf16, #tpu.memory_space<vmem>>, vector<72x8xbf16>
    %cst = arith.constant dense<0.000000e+00> : vector<64x8xf32>
    %6 = tpu.matmul %4, %5, %cst {dimension_numbers = #tpu.dot_dimension_numbers<[1], [0], [0], [1], [0, 0, 1, 1], [], []>} : vector<64x72xbf16>, vector<72x8xbf16>, vector<64x8xf32> -> vector<64x8xf32>
    %c0_5 = arith.constant 0 : index
    %c0_6 = arith.constant 0 : index
    %7 = vector.load %arg4[%c0_5, %c0_6] : memref<1x8xf32, #tpu.memory_space<vmem>>, vector<1x8xf32>
    %8 = vector.broadcast %7 : vector<1x8xf32> to vector<64x8xf32>
    %9 = arith.mulf %6, %8 : vector<64x8xf32>
    %c0_7 = arith.constant 0 : index
    %c0_8 = arith.constant 0 : index
    %10 = vector.load %arg5[%c0_7, %c0_8] : memref<1x8xf32, #tpu.memory_space<vmem>>, vector<1x8xf32>
    %11 = vector.broadcast %10 : vector<1x8xf32> to vector<64x8xf32>
    %12 = arith.addf %9, %11 : vector<64x8xf32>
    %13 = arith.truncf %12 : vector<64x8xf32> to vector<64x8xbf16>
    %c0_9 = arith.constant 0 : index
    %c0_10 = arith.constant 0 : index
    %c0_11 = arith.constant 0 : index
    %14 = vector.load %arg6[%c0_9, %c0_10, %c0_11] : memref<1x64x8xbf16, #tpu.memory_space<vmem>>, vector<1x64x8xbf16>
    %15 = vector.shape_cast %14 : vector<1x64x8xbf16> to vector<64x8xbf16>
    %16 = vector.shape_cast %13 : vector<64x8xbf16> to vector<1x64x8xbf16>
    tpu.vector_store %arg6[%c0_9, %c0_10, %c0_11], %16 {strides = array<i32>} : memref<1x64x8xbf16, #tpu.memory_space<vmem>>, vector<1x64x8xbf16>,
    %c0_12 = arith.constant 0 : index
    %c0_13 = arith.constant 0 : index
    %c0_14 = arith.constant 0 : index
    %17 = vector.load %arg7[%c0_12, %c0_13, %c0_14] : memref<1x1x8xf32, #tpu.memory_space<vmem>>, vector<1x1x8xf32>
    %18 = vector.shape_cast %17 : vector<1x1x8xf32> to vector<1x8xf32>
    %cst_15 = arith.constant dense<0.000000e+00> : vector<8xf32>
    %19 = vector.multi_reduction <add>, %12, %cst_15 [0] : vector<64x8xf32> to vector<8xf32>
    %20 = vector.shape_cast %19 : vector<8xf32> to vector<1x8xf32>
    %21 = arith.addf %18, %20 : vector<1x8xf32>
    %c0_16 = arith.constant 0 : index
    %c0_17 = arith.constant 0 : index
    %c0_18 = arith.constant 0 : index
    %22 = vector.load %arg7[%c0_16, %c0_17, %c0_18] : memref<1x1x8xf32, #tpu.memory_space<vmem>>, vector<1x1x8xf32>
    %23 = vector.shape_cast %22 : vector<1x1x8xf32> to vector<1x8xf32>
    %24 = vector.shape_cast %21 : vector<1x8xf32> to vector<1x1x8xf32>
    tpu.vector_store %arg7[%c0_16, %c0_17, %c0_18], %24 {strides = array<i32>} : memref<1x1x8xf32, #tpu.memory_space<vmem>>, vector<1x1x8xf32>,
    return
  }
  func.func @transform_0(%arg0: i32, %arg1: i32) -> (i32, i32, i32) {
    %c0_i32 = arith.constant 0 : i32
    %c0_i32_0 = arith.constant 0 : i32
    return %arg0, %arg1, %c0_i32 : i32, i32, i32
  }
  func.func @transform_1(%arg0: i32, %arg1: i32) -> (i32, i32) {
    %c0_i32 = arith.constant 0 : i32
    %c0_i32_0 = arith.constant 0 : i32
    %c0_i32_1 = arith.constant 0 : i32
    return %c0_i32, %c0_i32_0 : i32, i32
  }
  func.func @transform_2(%arg0: i32, %arg1: i32) -> (i32, i32) {
    %c0_i32 = arith.constant 0 : i32
    %c0_i32_0 = arith.constant 0 : i32
    %c0_i32_1 = arith.constant 0 : i32
    return %c0_i32, %c0_i32_0 : i32, i32
  }
  func.func @transform_3(%arg0: i32, %arg1: i32) -> (i32, i32) {
    %c0_i32 = arith.constant 0 : i32
    %c0_i32_0 = arith.constant 0 : i32
    %c0_i32_1 = arith.constant 0 : i32
    return %c0_i32, %c0_i32_0 : i32, i32
  }
  func.func @transform_4(%arg0: i32, %arg1: i32) -> (i32, i32, i32) {
    %c0_i32 = arith.constant 0 : i32
    %c0_i32_0 = arith.constant 0 : i32
    return %arg0, %arg1, %c0_i32 : i32, i32, i32
  }
  func.func @transform_5(%arg0: i32, %arg1: i32) -> (i32, i32, i32) {
    %c0_i32 = arith.constant 0 : i32
    %c0_i32_0 = arith.constant 0 : i32
    %c0_i32_1 = arith.constant 0 : i32
    return %arg0, %c0_i32, %c0_i32_0 : i32, i32, i32
  }
}

module attributes {stable_mosaic.version = 11 : i64} {
  func.func @_se_kernel(%arg0: i32, %arg1: memref<2x8xf32, #tpu.memory_space<vmem>>, %arg2: memref<8x2xf32, #tpu.memory_space<vmem>>, %arg3: memref<1x2xf32, #tpu.memory_space<vmem>>, %arg4: memref<2x8xf32, #tpu.memory_space<vmem>>, %arg5: memref<1x8xf32, #tpu.memory_space<vmem>>, %arg6: memref<2x8xf32, #tpu.memory_space<vmem>>) attributes {dimension_semantics = [#tpu.dimension_semantics<arbitrary>], iteration_bounds = array<i64: 1>, scalar_prefetch = 0 : i64, scratch_operands = 0 : i64, tpu.core_type = #tpu.core_type<tc>, window_params = [{pipeline_mode = #tpu.pipeline_mode<synchronous>, transform_indices = @transform_0, window_bounds = array<i64: 2, 8>}, {pipeline_mode = #tpu.pipeline_mode<synchronous>, transform_indices = @transform_1, window_bounds = array<i64: 8, 2>}, {pipeline_mode = #tpu.pipeline_mode<synchronous>, transform_indices = @transform_2, window_bounds = array<i64: 1, 2>}, {pipeline_mode = #tpu.pipeline_mode<synchronous>, transform_indices = @transform_3, window_bounds = array<i64: 2, 8>}, {pipeline_mode = #tpu.pipeline_mode<synchronous>, transform_indices = @transform_4, window_bounds = array<i64: 1, 8>}, {pipeline_mode = #tpu.pipeline_mode<synchronous>, transform_indices = @transform_5, window_bounds = array<i64: 2, 8>}]} {
    %c0 = arith.constant 0 : index
    %c0_0 = arith.constant 0 : index
    %0 = vector.load %arg1[%c0, %c0_0] : memref<2x8xf32, #tpu.memory_space<vmem>>, vector<2x8xf32>
    %cst = arith.constant 1.562500e-02 : f32
    %1 = vector.broadcast %cst : f32 to vector<2x8xf32>
    %2 = arith.mulf %0, %1 : vector<2x8xf32>
    %c0_1 = arith.constant 0 : index
    %c0_2 = arith.constant 0 : index
    %3 = vector.load %arg2[%c0_1, %c0_2] : memref<8x2xf32, #tpu.memory_space<vmem>>, vector<8x2xf32>
    %cst_3 = arith.constant dense<0.000000e+00> : vector<2x2xf32>
    %4 = tpu.matmul %2, %3, %cst_3 {dimension_numbers = #tpu.dot_dimension_numbers<[1], [0], [0], [1], [0, 0, 1, 1], [], []>} : vector<2x8xf32>, vector<8x2xf32>, vector<2x2xf32> -> vector<2x2xf32>
    %c0_4 = arith.constant 0 : index
    %c0_5 = arith.constant 0 : index
    %5 = vector.load %arg3[%c0_4, %c0_5] : memref<1x2xf32, #tpu.memory_space<vmem>>, vector<1x2xf32>
    %6 = vector.broadcast %5 : vector<1x2xf32> to vector<2x2xf32>
    %7 = arith.addf %4, %6 : vector<2x2xf32>
    %cst_6 = arith.constant 0.000000e+00 : f32
    %8 = vector.broadcast %cst_6 : f32 to vector<2x2xf32>
    %9 = arith.maximumf %7, %8 : vector<2x2xf32>
    %c0_7 = arith.constant 0 : index
    %c0_8 = arith.constant 0 : index
    %10 = vector.load %arg4[%c0_7, %c0_8] : memref<2x8xf32, #tpu.memory_space<vmem>>, vector<2x8xf32>
    %cst_9 = arith.constant dense<0.000000e+00> : vector<2x8xf32>
    %11 = tpu.matmul %9, %10, %cst_9 {dimension_numbers = #tpu.dot_dimension_numbers<[1], [0], [0], [1], [0, 0, 1, 1], [], []>} : vector<2x2xf32>, vector<2x8xf32>, vector<2x8xf32> -> vector<2x8xf32>
    %c0_10 = arith.constant 0 : index
    %c0_11 = arith.constant 0 : index
    %12 = vector.load %arg5[%c0_10, %c0_11] : memref<1x8xf32, #tpu.memory_space<vmem>>, vector<1x8xf32>
    %13 = vector.broadcast %12 : vector<1x8xf32> to vector<2x8xf32>
    %14 = arith.addf %11, %13 : vector<2x8xf32>
    %15 = arith.negf %14 : vector<2x8xf32>
    %16 = math.exp %15 : vector<2x8xf32>
    %cst_12 = arith.constant 1.000000e+00 : f32
    %17 = vector.broadcast %cst_12 : f32 to vector<2x8xf32>
    %18 = arith.addf %17, %16 : vector<2x8xf32>
    %19 = arith.divf %17, %18 : vector<2x8xf32>
    %c0_13 = arith.constant 0 : index
    %c0_14 = arith.constant 0 : index
    %20 = vector.load %arg6[%c0_13, %c0_14] : memref<2x8xf32, #tpu.memory_space<vmem>>, vector<2x8xf32>
    tpu.vector_store %arg6[%c0_13, %c0_14], %19 {strides = array<i32>} : memref<2x8xf32, #tpu.memory_space<vmem>>, vector<2x8xf32>,
    return
  }
  func.func @transform_0(%arg0: i32) -> (i32, i32) {
    %c0_i32 = arith.constant 0 : i32
    %c0_i32_0 = arith.constant 0 : i32
    %c0_i32_1 = arith.constant 0 : i32
    return %c0_i32, %c0_i32_0 : i32, i32
  }
  func.func @transform_1(%arg0: i32) -> (i32, i32) {
    %c0_i32 = arith.constant 0 : i32
    %c0_i32_0 = arith.constant 0 : i32
    %c0_i32_1 = arith.constant 0 : i32
    return %c0_i32, %c0_i32_0 : i32, i32
  }
  func.func @transform_2(%arg0: i32) -> (i32, i32) {
    %c0_i32 = arith.constant 0 : i32
    %c0_i32_0 = arith.constant 0 : i32
    %c0_i32_1 = arith.constant 0 : i32
    return %c0_i32, %c0_i32_0 : i32, i32
  }
  func.func @transform_3(%arg0: i32) -> (i32, i32) {
    %c0_i32 = arith.constant 0 : i32
    %c0_i32_0 = arith.constant 0 : i32
    %c0_i32_1 = arith.constant 0 : i32
    return %c0_i32, %c0_i32_0 : i32, i32
  }
  func.func @transform_4(%arg0: i32) -> (i32, i32) {
    %c0_i32 = arith.constant 0 : i32
    %c0_i32_0 = arith.constant 0 : i32
    %c0_i32_1 = arith.constant 0 : i32
    return %c0_i32, %c0_i32_0 : i32, i32
  }
  func.func @transform_5(%arg0: i32) -> (i32, i32) {
    %c0_i32 = arith.constant 0 : i32
    %c0_i32_0 = arith.constant 0 : i32
    %c0_i32_1 = arith.constant 0 : i32
    return %c0_i32, %c0_i32_0 : i32, i32
  }
}

module attributes {stable_mosaic.version = 11 : i64} {
  func.func @_matmul_affine_kernel(%arg0: i32, %arg1: memref<128x4xbf16, #tpu.memory_space<vmem>>, %arg2: memref<4x4xbf16, #tpu.memory_space<vmem>>, %arg3: memref<1x4xf32, #tpu.memory_space<vmem>>, %arg4: memref<1x4xf32, #tpu.memory_space<vmem>>, %arg5: memref<128x4xbf16, #tpu.memory_space<vmem>>) attributes {dimension_semantics = [#tpu.dimension_semantics<parallel>], iteration_bounds = array<i64: 1>, scalar_prefetch = 0 : i64, scratch_operands = 0 : i64, tpu.core_type = #tpu.core_type<tc>, window_params = [{transform_indices = @transform_0, window_bounds = array<i64: 128, 4>}, {pipeline_mode = #tpu.pipeline_mode<synchronous>, transform_indices = @transform_1, window_bounds = array<i64: 4, 4>}, {pipeline_mode = #tpu.pipeline_mode<synchronous>, transform_indices = @transform_2, window_bounds = array<i64: 1, 4>}, {pipeline_mode = #tpu.pipeline_mode<synchronous>, transform_indices = @transform_3, window_bounds = array<i64: 1, 4>}, {transform_indices = @transform_4, window_bounds = array<i64: 128, 4>}]} {
    %c0 = arith.constant 0 : index
    %c0_0 = arith.constant 0 : index
    %0 = vector.load %arg1[%c0, %c0_0] : memref<128x4xbf16, #tpu.memory_space<vmem>>, vector<128x4xbf16>
    %cst = arith.constant 0.000000e+00 : bf16
    %1 = vector.broadcast %cst : bf16 to vector<128x4xbf16>
    %2 = arith.maximumf %0, %1 : vector<128x4xbf16>
    %c0_1 = arith.constant 0 : index
    %c0_2 = arith.constant 0 : index
    %3 = vector.load %arg2[%c0_1, %c0_2] : memref<4x4xbf16, #tpu.memory_space<vmem>>, vector<4x4xbf16>
    %cst_3 = arith.constant dense<0.000000e+00> : vector<128x4xf32>
    %4 = tpu.matmul %2, %3, %cst_3 {dimension_numbers = #tpu.dot_dimension_numbers<[1], [0], [0], [1], [0, 0, 1, 1], [], []>} : vector<128x4xbf16>, vector<4x4xbf16>, vector<128x4xf32> -> vector<128x4xf32>
    %c0_4 = arith.constant 0 : index
    %c0_5 = arith.constant 0 : index
    %5 = vector.load %arg3[%c0_4, %c0_5] : memref<1x4xf32, #tpu.memory_space<vmem>>, vector<1x4xf32>
    %6 = vector.broadcast %5 : vector<1x4xf32> to vector<128x4xf32>
    %7 = arith.mulf %4, %6 : vector<128x4xf32>
    %c0_6 = arith.constant 0 : index
    %c0_7 = arith.constant 0 : index
    %8 = vector.load %arg4[%c0_6, %c0_7] : memref<1x4xf32, #tpu.memory_space<vmem>>, vector<1x4xf32>
    %9 = vector.broadcast %8 : vector<1x4xf32> to vector<128x4xf32>
    %10 = arith.addf %7, %9 : vector<128x4xf32>
    %11 = arith.truncf %10 : vector<128x4xf32> to vector<128x4xbf16>
    %c0_8 = arith.constant 0 : index
    %c0_9 = arith.constant 0 : index
    %12 = vector.load %arg5[%c0_8, %c0_9] : memref<128x4xbf16, #tpu.memory_space<vmem>>, vector<128x4xbf16>
    tpu.vector_store %arg5[%c0_8, %c0_9], %11 {strides = array<i32>} : memref<128x4xbf16, #tpu.memory_space<vmem>>, vector<128x4xbf16>,
    return
  }
  func.func @transform_0(%arg0: i32) -> (i32, i32) {
    %c0_i32 = arith.constant 0 : i32
    %c0_i32_0 = arith.constant 0 : i32
    return %arg0, %c0_i32 : i32, i32
  }
  func.func @transform_1(%arg0: i32) -> (i32, i32) {
    %c0_i32 = arith.constant 0 : i32
    %c0_i32_0 = arith.constant 0 : i32
    %c0_i32_1 = arith.constant 0 : i32
    return %c0_i32, %c0_i32_0 : i32, i32
  }
  func.func @transform_2(%arg0: i32) -> (i32, i32) {
    %c0_i32 = arith.constant 0 : i32
    %c0_i32_0 = arith.constant 0 : i32
    %c0_i32_1 = arith.constant 0 : i32
    return %c0_i32, %c0_i32_0 : i32, i32
  }
  func.func @transform_3(%arg0: i32) -> (i32, i32) {
    %c0_i32 = arith.constant 0 : i32
    %c0_i32_0 = arith.constant 0 : i32
    %c0_i32_1 = arith.constant 0 : i32
    return %c0_i32, %c0_i32_0 : i32, i32
  }
  func.func @transform_4(%arg0: i32) -> (i32, i32) {
    %c0_i32 = arith.constant 0 : i32
    %c0_i32_0 = arith.constant 0 : i32
    return %arg0, %c0_i32 : i32, i32
  }
}

module attributes {stable_mosaic.version = 11 : i64} {
  func.func @_combine_kernel(%arg0: i32, %arg1: i32, %arg2: memref<1x64x8xbf16, #tpu.memory_space<vmem>>, %arg3: memref<1x64x8xbf16, #tpu.memory_space<vmem>>, %arg4: memref<1x64x8xbf16, #tpu.memory_space<vmem>>, %arg5: memref<1x1x8xf32, #tpu.memory_space<vmem>>, %arg6: memref<1x1x8xf32, #tpu.memory_space<vmem>>, %arg7: memref<1x64x8xf32, #tpu.memory_space<vmem>>) attributes {dimension_semantics = [#tpu.dimension_semantics<parallel>, #tpu.dimension_semantics<parallel>], iteration_bounds = array<i64: 2, 1>, scalar_prefetch = 0 : i64, scratch_operands = 0 : i64, tpu.core_type = #tpu.core_type<tc>, window_params = [{transform_indices = @transform_0, window_bounds = array<i64: 1, 64, 8>}, {transform_indices = @transform_1, window_bounds = array<i64: 1, 64, 8>}, {transform_indices = @transform_2, window_bounds = array<i64: 1, 64, 8>}, {transform_indices = @transform_3, window_bounds = array<i64: 1, 1, 8>}, {transform_indices = @transform_4, window_bounds = array<i64: 1, 1, 8>}, {transform_indices = @transform_5, window_bounds = array<i64: 1, 64, 8>}]} {
    %c0 = arith.constant 0 : index
    %c0_0 = arith.constant 0 : index
    %c0_1 = arith.constant 0 : index
    %0 = vector.load %arg2[%c0, %c0_0, %c0_1] : memref<1x64x8xbf16, #tpu.memory_space<vmem>>, vector<1x64x8xbf16>
    %1 = vector.shape_cast %0 : vector<1x64x8xbf16> to vector<64x8xbf16>
    %2 = arith.extf %1 : vector<64x8xbf16> to vector<64x8xf32>
    %c0_2 = arith.constant 0 : index
    %c0_3 = arith.constant 0 : index
    %c0_4 = arith.constant 0 : index
    %3 = vector.load %arg3[%c0_2, %c0_3, %c0_4] : memref<1x64x8xbf16, #tpu.memory_space<vmem>>, vector<1x64x8xbf16>
    %4 = vector.shape_cast %3 : vector<1x64x8xbf16> to vector<64x8xbf16>
    %5 = arith.extf %4 : vector<64x8xbf16> to vector<64x8xf32>
    %c0_5 = arith.constant 0 : index
    %c0_6 = arith.constant 0 : index
    %c0_7 = arith.constant 0 : index
    %6 = vector.load %arg5[%c0_5, %c0_6, %c0_7] : memref<1x1x8xf32, #tpu.memory_space<vmem>>, vector<1x1x8xf32>
    %7 = vector.shape_cast %6 : vector<1x1x8xf32> to vector<1x8xf32>
    %8 = vector.broadcast %7 : vector<1x8xf32> to vector<64x8xf32>
    %9 = arith.mulf %5, %8 : vector<64x8xf32>
    %c0_8 = arith.constant 0 : index
    %c0_9 = arith.constant 0 : index
    %c0_10 = arith.constant 0 : index
    %10 = vector.load %arg4[%c0_8, %c0_9, %c0_10] : memref<1x64x8xbf16, #tpu.memory_space<vmem>>, vector<1x64x8xbf16>
    %11 = vector.shape_cast %10 : vector<1x64x8xbf16> to vector<64x8xbf16>
    %12 = arith.extf %11 : vector<64x8xbf16> to vector<64x8xf32>
    %c0_11 = arith.constant 0 : index
    %c0_12 = arith.constant 0 : index
    %c0_13 = arith.constant 0 : index
    %13 = vector.load %arg6[%c0_11, %c0_12, %c0_13] : memref<1x1x8xf32, #tpu.memory_space<vmem>>, vector<1x1x8xf32>
    %14 = vector.shape_cast %13 : vector<1x1x8xf32> to vector<1x8xf32>
    %15 = vector.broadcast %14 : vector<1x8xf32> to vector<64x8xf32>
    %16 = arith.mulf %12, %15 : vector<64x8xf32>
    %17 = arith.addf %9, %16 : vector<64x8xf32>
    %cst = arith.constant 5.000000e-01 : f32
    %18 = vector.broadcast %cst : f32 to vector<64x8xf32>
    %19 = arith.mulf %18, %17 : vector<64x8xf32>
    %20 = arith.addf %2, %19 : vector<64x8xf32>
    %c0_14 = arith.constant 0 : index
    %c0_15 = arith.constant 0 : index
    %c0_16 = arith.constant 0 : index
    %21 = vector.load %arg7[%c0_14, %c0_15, %c0_16] : memref<1x64x8xf32, #tpu.memory_space<vmem>>, vector<1x64x8xf32>
    %22 = vector.shape_cast %21 : vector<1x64x8xf32> to vector<64x8xf32>
    %23 = vector.shape_cast %20 : vector<64x8xf32> to vector<1x64x8xf32>
    tpu.vector_store %arg7[%c0_14, %c0_15, %c0_16], %23 {strides = array<i32>} : memref<1x64x8xf32, #tpu.memory_space<vmem>>, vector<1x64x8xf32>,
    return
  }
  func.func @transform_0(%arg0: i32, %arg1: i32) -> (i32, i32, i32) {
    %c0_i32 = arith.constant 0 : i32
    %c0_i32_0 = arith.constant 0 : i32
    return %arg0, %arg1, %c0_i32 : i32, i32, i32
  }
  func.func @transform_1(%arg0: i32, %arg1: i32) -> (i32, i32, i32) {
    %c0_i32 = arith.constant 0 : i32
    %c0_i32_0 = arith.constant 0 : i32
    return %arg0, %arg1, %c0_i32 : i32, i32, i32
  }
  func.func @transform_2(%arg0: i32, %arg1: i32) -> (i32, i32, i32) {
    %c0_i32 = arith.constant 0 : i32
    %c0_i32_0 = arith.constant 0 : i32
    return %arg0, %arg1, %c0_i32 : i32, i32, i32
  }
  func.func @transform_3(%arg0: i32, %arg1: i32) -> (i32, i32, i32) {
    %c0_i32 = arith.constant 0 : i32
    %c0_i32_0 = arith.constant 0 : i32
    %c0_i32_1 = arith.constant 0 : i32
    return %arg0, %c0_i32, %c0_i32_0 : i32, i32, i32
  }
  func.func @transform_4(%arg0: i32, %arg1: i32) -> (i32, i32, i32) {
    %c0_i32 = arith.constant 0 : i32
    %c0_i32_0 = arith.constant 0 : i32
    %c0_i32_1 = arith.constant 0 : i32
    return %arg0, %c0_i32, %c0_i32_0 : i32, i32, i32
  }
  func.func @transform_5(%arg0: i32, %arg1: i32) -> (i32, i32, i32) {
    %c0_i32 = arith.constant 0 : i32
    %c0_i32_0 = arith.constant 0 : i32
    return %arg0, %arg1, %c0_i32 : i32, i32, i32
  }
}

</mosaic_0001>

<llo_original>
// kernel: basic_block_forward.8
$region0: #{basic_block_forward.8}
  #allocation0 [shape = 'u32[]', space=smem, size = 0x4, offset = 0x4, fixed_abs, tag = 'smem constant byte address 0x4 - core index']
  #allocation1 [shape = 'u32[72,128]{1,0:T(1,128)}', space=vmem, size = 0x9000, scoped, tag = 'internal scratch']
  %s0 = inlined_call_operand.vmem [shape: bf16[128,36], index: 0, kind: input, shape index: {}]
  %s1 = inlined_call_operand.vmem [shape: bf16[36,16], index: 1, kind: input, shape index: {}]
  %s2 = inlined_call_operand.vmem [shape: f32[1,16], index: 2, kind: input, shape index: {}]
  %s3 = inlined_call_operand.vmem [shape: f32[1,16], index: 3, kind: input, shape index: {}]
  %s4 = inlined_call_operand.vmem [shape: bf16[128,16], index: 4, kind: output, shape index: {}]
  %s5 = sld [smem:[#allocation0]]
  $region26: #{basic_block_forward.8} parent=0
    _
  %s7 = ssub.s32 1, %s5
  %s8 = scalar_select 0, %s7, %s5
  // Predicated region
  $region2: #{basic_block_forward.8} parent=0 // pred_check
    _
  $region3: #{basic_block_forward.8} parent=0 // pred_check_branch
    %10 = sbr.rel (0) target = $region5
  $region4: #{basic_block_forward.8} parent=0 // pred_region
    _
  $region5: #{basic_block_forward.8} parent=0 // pred_fallthru
    _
  // Predicated region
  $region6: #{basic_block_forward.8} parent=0 // pred_check
    _
  $region7: #{basic_block_forward.8} parent=0 // pred_check_branch
    %12 = sbr.rel (0) target = $region9
  $region8: #{basic_block_forward.8} parent=0 // pred_region
    _
  $region9: #{basic_block_forward.8} parent=0 // pred_fallthru
    _
  // Predicated region
  $region10: #{basic_block_forward.8} parent=0 // pred_check
    _
  $region11: #{basic_block_forward.8} parent=0 // pred_check_branch
    %14 = sbr.rel (0) target = $region13
  $region12: #{basic_block_forward.8} parent=0 // pred_region
    _
  $region13: #{basic_block_forward.8} parent=0 // pred_fallthru
    _
  // Predicated region
  $region14: #{basic_block_forward.8} parent=0 // pred_check
    _
  $region15: #{basic_block_forward.8} parent=0 // pred_check_branch
    %16 = sbr.rel (0) target = $region17
  $region16: #{basic_block_forward.8} parent=0 // pred_region
    _
  $region17: #{basic_block_forward.8} parent=0 // pred_fallthru
    _
  %v18 = vld [vmem:[%s0] sm:$0xf]
  %v19 = vld [vmem:[%s0 + $0x4] sm:$0xf]
  %v20 = vld [vmem:[%s0 + $0x8] sm:$0xf]
  %v21 = vld [vmem:[%s0 + $0xc] sm:$0xf]
  %v22 = vld [vmem:[%s0 + $0x10] sm:$0xf]
  %v23 = vld [vmem:[%s0 + $0x14] sm:$0xf]
  %v24 = vld [vmem:[%s0 + $0x18] sm:$0xf]
  %v25 = vld [vmem:[%s0 + $0x1c] sm:$0xf]
  %v26 = vld [vmem:[%s0 + $0x20] sm:$0xf]
  %v27 = vld [vmem:[%s0 + $0x24] sm:$0xf]
  %v28 = vld [vmem:[%s0 + $0x28] sm:$0xf]
  %v29 = vld [vmem:[%s0 + $0x2c] sm:$0xf]
  %v30 = vld [vmem:[%s0 + $0x30] sm:$0xf]
  %v31 = vld [vmem:[%s0 + $0x34] sm:$0xf]
  %v32 = vld [vmem:[%s0 + $0x38] sm:$0xf]
  %v33 = vld [vmem:[%s0 + $0x3c] sm:$0xf]
  %v34 = vunpack.c.l.bf16 %v18
  %v35 = vunpack.c.l.bf16 %v19
  %v36 = vunpack.c.l.bf16 %v20
  %v37 = vunpack.c.l.bf16 %v21
  %v38 = vunpack.c.l.bf16 %v22
  %v39 = vunpack.c.l.bf16 %v23
  %v40 = vunpack.c.l.bf16 %v24
  %v41 = vunpack.c.l.bf16 %v25
  %v42 = vunpack.c.l.bf16 %v26
  %v43 = vunpack.c.l.bf16 %v27
  %v44 = vunpack.c.l.bf16 %v28
  %v45 = vunpack.c.l.bf16 %v29
  %v46 = vunpack.c.l.bf16 %v30
  %v47 = vunpack.c.l.bf16 %v31
  %v48 = vunpack.c.l.bf16 %v32
  %v49 = vunpack.c.l.bf16 %v33
  %v50 = vmax.f32 %v34, 0.0
  %v51 = vmax.f32 %v35, 0.0
  %v52 = vmax.f32 %v36, 0.0
  %v53 = vmax.f32 %v37, 0.0
  %v54 = vmax.f32 %v38, 0.0
  %v55 = vmax.f32 %v39, 0.0
  %v56 = vmax.f32 %v40, 0.0
  %v57 = vmax.f32 %v41, 0.0
  %v58 = vmax.f32 %v42, 0.0
  %v59 = vmax.f32 %v43, 0.0
  %v60 = vmax.f32 %v44, 0.0
  %v61 = vmax.f32 %v45, 0.0
  %v62 = vmax.f32 %v46, 0.0
  %v63 = vmax.f32 %v47, 0.0
  %v64 = vmax.f32 %v48, 0.0
  %v65 = vmax.f32 %v49, 0.0
  %v66 = vpack.c.bf16 %v51, %v50
  %v67 = vpack.c.bf16 %v53, %v52
  %v68 = vpack.c.bf16 %v55, %v54
  %v69 = vpack.c.bf16 %v57, %v56
  %v70 = vpack.c.bf16 %v59, %v58
  %v71 = vpack.c.bf16 %v61, %v60
  %v72 = vpack.c.bf16 %v63, %v62
  %v73 = vpack.c.bf16 %v65, %v64
  %v74 = vld [vmem:[%s1] sm:$0xf]
  %v75 = vld [vmem:[%s1 + $0x4] sm:$0xf]
  %v76 = vld [vmem:[%s1 + $0x8] sm:$0xf]
  %v77 = vld [vmem:[%s1 + $0xc] sm:$0xf]
  %v78 = vld [vmem:[%s1 + $0x10] sm:$0x3]
  %v84 = vunpack.c.l.b16 %v74
  %v85 = vunpack.c.l.b16 %v75
  %v86 = vunpack.c.l.b16 %v76
  %v87 = vunpack.c.l.b16 %v77
  %v88 = vunpack.c.l.b16 %v78
  %v89 = vpack.c.b16 %v85, %v84
  %v90 = vpack.c.b16 %v87, %v86
  %v91 = vpack.c.b16 %v88, %v88
  %vm94 = vcmask 293888
  %v96 = vsel %vm94, %v66, 0
  %v99 = vsel %vm94, %v67, 0
  %v102 = vsel %vm94, %v68, 0
  %v105 = vsel %vm94, %v69, 0
  %v108 = vsel %vm94, %v70, 0
  %v111 = vsel %vm94, %v71, 0
  %v114 = vsel %vm94, %v72, 0
  %v117 = vsel %vm94, %v73, 0
  %vm119 = vcmask 1041408
  %v121 = vsel %vm119, %v91, 0
  %123 = vmatpush.bf16.msra.mxu0 0
  %124 = vmatpush.bf16.msra.mxu0 0
  %125 = vmatpush.bf16.msra.mxu0 0
  %126 = vmatpush.bf16.msra.mxu0 0
  %127 = vmatpush.bf16.msra.mxu0 0
  %128 = vmatpush.bf16.msra.mxu0 %v121
  %129 = vmatpush.bf16.msra.mxu0 %v90
  %130 = vmatpush.bf16.msra.mxu0 %v89
  %131 = vmatmul.bf16.gmra.mxu0 %v96
  %v132 = vpop.f32.mrf.mxu0
  %v133 = vadd.f32 0.0, %v132
  %v134 = vpop.f32.mrf.mxu0
  %v135 = vadd.f32 0.0, %v134
  %136 = vmatmul.bf16.gmra.mxu0 %v99
  %v137 = vpop.f32.mrf.mxu0
  %v138 = vadd.f32 0.0, %v137
  %v139 = vpop.f32.mrf.mxu0
  %v140 = vadd.f32 0.0, %v139
  %141 = vmatmul.bf16.gmra.mxu0 %v102
  %v142 = vpop.f32.mrf.mxu0
  %v143 = vadd.f32 0.0, %v142
  %v144 = vpop.f32.mrf.mxu0
  %v145 = vadd.f32 0.0, %v144
  %146 = vmatmul.bf16.gmra.mxu0 %v105
  %v147 = vpop.f32.mrf.mxu0
  %v148 = vadd.f32 0.0, %v147
  %v149 = vpop.f32.mrf.mxu0
  %v150 = vadd.f32 0.0, %v149
  %151 = vmatmul.bf16.gmra.mxu0 %v108
  %v152 = vpop.f32.mrf.mxu0
  %v153 = vadd.f32 0.0, %v152
  %v154 = vpop.f32.mrf.mxu0
  %v155 = vadd.f32 0.0, %v154
  %156 = vmatmul.bf16.gmra.mxu0 %v111
  %v157 = vpop.f32.mrf.mxu0
  %v158 = vadd.f32 0.0, %v157
  %v159 = vpop.f32.mrf.mxu0
  %v160 = vadd.f32 0.0, %v159
  %161 = vmatmul.bf16.gmra.mxu0 %v114
  %v162 = vpop.f32.mrf.mxu0
  %v163 = vadd.f32 0.0, %v162
  %v164 = vpop.f32.mrf.mxu0
  %v165 = vadd.f32 0.0, %v164
  %166 = vmatmul.bf16.gmra.mxu0 %v117
  %v167 = vpop.f32.mrf.mxu0
  %v168 = vadd.f32 0.0, %v167
  %v169 = vpop.f32.mrf.mxu0
  %v170 = vadd.f32 0.0, %v169
  %171 = vdwg.mxu0
  %v172 = vld [vmem:[%s2] sm:$0x1]
  %v174 = vperm.slane %v172, 0
  %v176 = vmul.f32 %v133, %v174
  %v177 = vmul.f32 %v135, %v174
  %v178 = vmul.f32 %v138, %v174
  %v179 = vmul.f32 %v140, %v174
  %v180 = vmul.f32 %v143, %v174
  %v181 = vmul.f32 %v145, %v174
  %v182 = vmul.f32 %v148, %v174
  %v183 = vmul.f32 %v150, %v174
  %v184 = vmul.f32 %v153, %v174
  %v185 = vmul.f32 %v155, %v174
  %v186 = vmul.f32 %v158, %v174
  %v187 = vmul.f32 %v160, %v174
  %v188 = vmul.f32 %v163, %v174
  %v189 = vmul.f32 %v165, %v174
  %v190 = vmul.f32 %v168, %v174
  %v191 = vmul.f32 %v170, %v174
  %v192 = vld [vmem:[%s3] sm:$0x1]
  %v194 = vperm.slane %v192, 0
  %v196 = vadd.f32 %v176, %v194
  %v197 = vadd.f32 %v177, %v194
  %v198 = vadd.f32 %v178, %v194
  %v199 = vadd.f32 %v179, %v194
  %v200 = vadd.f32 %v180, %v194
  %v201 = vadd.f32 %v181, %v194
  %v202 = vadd.f32 %v182, %v194
  %v203 = vadd.f32 %v183, %v194
  %v204 = vadd.f32 %v184, %v194
  %v205 = vadd.f32 %v185, %v194
  %v206 = vadd.f32 %v186, %v194
  %v207 = vadd.f32 %v187, %v194
  %v208 = vadd.f32 %v188, %v194
  %v209 = vadd.f32 %v189, %v194
  %v210 = vadd.f32 %v190, %v194
  %v211 = vadd.f32 %v191, %v194
  %v212 = vmax.f32 %v196, 0.0
  %v213 = vmax.f32 %v197, 0.0
  %v214 = vmax.f32 %v198, 0.0
  %v215 = vmax.f32 %v199, 0.0
  %v216 = vmax.f32 %v200, 0.0
  %v217 = vmax.f32 %v201, 0.0
  %v218 = vmax.f32 %v202, 0.0
  %v219 = vmax.f32 %v203, 0.0
  %v220 = vmax.f32 %v204, 0.0
  %v221 = vmax.f32 %v205, 0.0
  %v222 = vmax.f32 %v206, 0.0
  %v223 = vmax.f32 %v207, 0.0
  %v224 = vmax.f32 %v208, 0.0
  %v225 = vmax.f32 %v209, 0.0
  %v226 = vmax.f32 %v210, 0.0
  %v227 = vmax.f32 %v211, 0.0
  %v228 = vpack.c.bf16 %v212, %v212
  %v229 = vpack.c.bf16 %v213, %v213
  %v230 = vpack.c.bf16 %v214, %v214
  %v231 = vpack.c.bf16 %v215, %v215
  %v232 = vpack.c.bf16 %v216, %v216
  %v233 = vpack.c.bf16 %v217, %v217
  %v234 = vpack.c.bf16 %v218, %v218
  %v235 = vpack.c.bf16 %v219, %v219
  %v236 = vpack.c.bf16 %v220, %v220
  %v237 = vpack.c.bf16 %v221, %v221
  %v238 = vpack.c.bf16 %v222, %v222
  %v239 = vpack.c.bf16 %v223, %v223
  %v240 = vpack.c.bf16 %v224, %v224
  %v241 = vpack.c.bf16 %v225, %v225
  %v242 = vpack.c.bf16 %v226, %v226
  %v243 = vpack.c.bf16 %v227, %v227
  %vm244 = vcmask 125952
  %245 = vst.msk [vmem:[%s4] sm:$0xf] %vm244, %v228
  %246 = vst.msk [vmem:[%s4 + $0x4] sm:$0xf] %vm244, %v229
  %247 = vst.msk [vmem:[%s4 + $0x8] sm:$0xf] %vm244, %v230
  %248 = vst.msk [vmem:[%s4 + $0xc] sm:$0xf] %vm244, %v231
  %249 = vst.msk [vmem:[%s4 + $0x10] sm:$0xf] %vm244, %v232
  %250 = vst.msk [vmem:[%s4 + $0x14] sm:$0xf] %vm244, %v233
  %251 = vst.msk [vmem:[%s4 + $0x18] sm:$0xf] %vm244, %v234
  %252 = vst.msk [vmem:[%s4 + $0x1c] sm:$0xf] %vm244, %v235
  %253 = vst.msk [vmem:[%s4 + $0x20] sm:$0xf] %vm244, %v236
  %254 = vst.msk [vmem:[%s4 + $0x24] sm:$0xf] %vm244, %v237
  %255 = vst.msk [vmem:[%s4 + $0x28] sm:$0xf] %vm244, %v238
  %256 = vst.msk [vmem:[%s4 + $0x2c] sm:$0xf] %vm244, %v239
  %257 = vst.msk [vmem:[%s4 + $0x30] sm:$0xf] %vm244, %v240
  %258 = vst.msk [vmem:[%s4 + $0x34] sm:$0xf] %vm244, %v241
  %259 = vst.msk [vmem:[%s4 + $0x38] sm:$0xf] %vm244, %v242
  %260 = vst.msk [vmem:[%s4 + $0x3c] sm:$0xf] %vm244, %v243
  // Predicated region
  $region18: #{basic_block_forward.8} parent=0 // pred_check
    _
  $region19: #{basic_block_forward.8} parent=0 // pred_check_branch
    %262 = sbr.rel (0) target = $region21
  $region20: #{basic_block_forward.8} parent=0 // pred_region
    _
  $region21: #{basic_block_forward.8} parent=0 // pred_fallthru
    _
  // Predicated region
  $region22: #{basic_block_forward.8} parent=0 // pred_check
    _
  $region23: #{basic_block_forward.8} parent=0 // pred_check_branch
    %264 = sbr.rel (0) target = $region25
  $region24: #{basic_block_forward.8} parent=0 // pred_region
    _
  $region25: #{basic_block_forward.8} parent=0 // pred_fallthru
    _

// kernel: basic_block_forward.12
$region0: #{basic_block_forward.12}
  #allocation0 [shape = 'u32[]', space=smem, size = 0x4, offset = 0x4, fixed_abs, tag = 'smem constant byte address 0x4 - core index']
  #allocation1 [shape = 'u32[72,128]{1,0:T(1,128)}', space=vmem, size = 0x9000, scoped, tag = 'internal scratch']
  %s0 = inlined_call_operand.vmem [shape: f32[2,8], index: 0, kind: input, shape index: {}]
  %s1 = inlined_call_operand.vmem [shape: f32[8,2], index: 1, kind: input, shape index: {}]
  %s2 = inlined_call_operand.vmem [shape: f32[1,2], index: 2, kind: input, shape index: {}]
  %s3 = inlined_call_operand.vmem [shape: f32[2,8], index: 3, kind: input, shape index: {}]
  %s4 = inlined_call_operand.vmem [shape: f32[1,8], index: 4, kind: input, shape index: {}]
  %s5 = inlined_call_operand.vmem [shape: f32[2,8], index: 5, kind: output, shape index: {}]
  %s6 = sld [smem:[#allocation0]]
  $region30: #{basic_block_forward.12} parent=0
    _
  %s8 = ssub.s32 1, %s6
  %s9 = scalar_select 0, %s8, %s6
  // Predicated region
  $region2: #{basic_block_forward.12} parent=0 // pred_check
    _
  $region3: #{basic_block_forward.12} parent=0 // pred_check_branch
    %11 = sbr.rel (0) target = $region5
  $region4: #{basic_block_forward.12} parent=0 // pred_region
    _
  $region5: #{basic_block_forward.12} parent=0 // pred_fallthru
    _
  // Predicated region
  $region6: #{basic_block_forward.12} parent=0 // pred_check
    _
  $region7: #{basic_block_forward.12} parent=0 // pred_check_branch
    %13 = sbr.rel (0) target = $region9
  $region8: #{basic_block_forward.12} parent=0 // pred_region
    _
  $region9: #{basic_block_forward.12} parent=0 // pred_fallthru
    _
  // Predicated region
  $region10: #{basic_block_forward.12} parent=0 // pred_check
    _
  $region11: #{basic_block_forward.12} parent=0 // pred_check_branch
    %15 = sbr.rel (0) target = $region13
  $region12: #{basic_block_forward.12} parent=0 // pred_region
    _
  $region13: #{basic_block_forward.12} parent=0 // pred_fallthru
    _
  // Predicated region
  $region14: #{basic_block_forward.12} parent=0 // pred_check
    _
  $region15: #{basic_block_forward.12} parent=0 // pred_check_branch
    %17 = sbr.rel (0) target = $region17
  $region16: #{basic_block_forward.12} parent=0 // pred_region
    _
  $region17: #{basic_block_forward.12} parent=0 // pred_fallthru
    _
  // Predicated region
  $region18: #{basic_block_forward.12} parent=0 // pred_check
    _
  $region19: #{basic_block_forward.12} parent=0 // pred_check_branch
    %19 = sbr.rel (0) target = $region21
  $region20: #{basic_block_forward.12} parent=0 // pred_region
    _
  $region21: #{basic_block_forward.12} parent=0 // pred_fallthru
    _
  %v20 = vld [vmem:[%s0] sm:$0x3]
  %v21 = vmul.f32 %v20, 0.015625
  %v22 = vld [vmem:[%s1] sm:$0xff]
  %v23 = vld [vmem:[%s2] sm:$0x1]
  %v25 = vperm.slane %v23, 0
  %vm27 = vcmask 64512
  %v29 = vsel %vm27, %v21, 0
  %31 = vmatpush.msra.mxu0 0.0
  %32 = vmatpush.msra.mxu0 0.0
  %33 = vmatpush.msra.mxu0 0.0
  %34 = vmatpush.msra.mxu0 0.0
  %35 = vmatpush.msra.mxu0 0.0
  %36 = vmatpush.msra.mxu0 0.0
  %37 = vmatpush.msra.mxu0 0.0
  %38 = vmatpush.msra.mxu0 0.0
  %39 = vmatpush.msra.mxu0 0.0
  %40 = vmatpush.msra.mxu0 0.0
  %41 = vmatpush.msra.mxu0 0.0
  %42 = vmatpush.msra.mxu0 0.0
  %43 = vmatpush.msra.mxu0 0.0
  %44 = vmatpush.msra.mxu0 0.0
  %45 = vmatpush.msra.mxu0 0.0
  %46 = vmatpush.msra.mxu0 %v22
  %47 = vmatmul.f32.gmra.mxu0 %v29
  %v48 = vpop.f32.mrf.mxu0
  %v49 = vadd.f32 %v25, %v48
  %50 = vdwg.mxu0
  %v51 = vmax.f32 %v49, 0.0
  %v52 = vld [vmem:[%s3] sm:$0x3]
  %v53 = vld [vmem:[%s4] sm:$0x1]
  %v55 = vperm.slane %v53, 0
  %vm57 = vcmask 15360
  %v59 = vsel %vm57, %v51, 0
  %vm61 = vcmask 1041408
  %v63 = vsel %vm61, %v52, 0
  %65 = vmatpush.msra.mxu0 0.0
  %66 = vmatpush.msra.mxu0 0.0
  %67 = vmatpush.msra.mxu0 0.0
  %68 = vmatpush.msra.mxu0 0.0
  %69 = vmatpush.msra.mxu0 0.0
  %70 = vmatpush.msra.mxu0 0.0
  %71 = vmatpush.msra.mxu0 0.0
  %72 = vmatpush.msra.mxu0 0.0
  %73 = vmatpush.msra.mxu0 0.0
  %74 = vmatpush.msra.mxu0 0.0
  %75 = vmatpush.msra.mxu0 0.0
  %76 = vmatpush.msra.mxu0 0.0
  %77 = vmatpush.msra.mxu0 0.0
  %78 = vmatpush.msra.mxu0 0.0
  %79 = vmatpush.msra.mxu0 0.0
  %80 = vmatpush.msra.mxu0 %v63
  %81 = vmatmul.f32.gmra.mxu0 %v59
  %v82 = vpop.f32.mrf.mxu0
  %v83 = vadd.f32 %v55, %v82
  %84 = vdwg.mxu0
  %v85 = vxor.u32 %v83, 2147483648
  %v86 = vmul.f32 %v85, 1.442695
  %v87 = vpow.pop %v86
  %v88 = vadd.f32 %v87, 1.0
  %v89 = vrcp.pop %v88
  %v90 = vmul.f32 %v88, %v89
  %v91 = vsub.f32 1.0, %v90
  %v92 = vmul.f32 %v89, %v91
  %v93 = vadd.f32 %v89, %v92
  %vm94 = vweird.f32 %v88
  %vm95 = vweird.f32 %v89
  %vm96 = vmor %vm94, %vm95
  %v97 = vsel %vm96, %v89, %v93
  %v98 = vand.u32 2147483647, %v88
  %vm99 = vcmp.eq.f32.partialorder %v98, 8.507059e+37
  %v100 = vand.u32 %v88, 2147483648
  %v101 = vor.u32 1.1754944e-38, %v100
  %v102 = vsel %vm99, %v101, %v97
  %v103 = vmul.f32 1.0, %v102
  %vm104 = vcmask 58368
  %105 = vst.msk [vmem:[%s5] sm:$0x3] %vm104, %v103
  // Predicated region
  $region22: #{basic_block_forward.12} parent=0 // pred_check
    _
  $region23: #{basic_block_forward.12} parent=0 // pred_check_branch
    %107 = sbr.rel (0) target = $region25
  $region24: #{basic_block_forward.12} parent=0 // pred_region
    _
  $region25: #{basic_block_forward.12} parent=0 // pred_fallthru
    _
  // Predicated region
  $region26: #{basic_block_forward.12} parent=0 // pred_check
    _
  $region27: #{basic_block_forward.12} parent=0 // pred_check_branch
    %109 = sbr.rel (0) target = $region29
  $region28: #{basic_block_forward.12} parent=0 // pred_region
    _
  $region29: #{basic_block_forward.12} parent=0 // pred_fallthru
    _

// kernel: basic_block_forward.11
$region0: #{basic_block_forward.11}
  #allocation0 [shape = 'u32[]', space=smem, size = 0x4, offset = 0x4, fixed_abs, tag = 'smem constant byte address 0x4 - core index']
  #allocation1 [shape = 'u32[72,128]{1,0:T(1,128)}', space=vmem, size = 0x9000, scoped, tag = 'internal scratch']
  %s0 = inlined_call_operand.vmem [shape: bf16[2,64,72], index: 0, kind: input, shape index: {}]
  %s1 = inlined_call_operand.vmem [shape: bf16[72,8], index: 1, kind: input, shape index: {}]
  %s2 = inlined_call_operand.vmem [shape: f32[1,8], index: 2, kind: input, shape index: {}]
  %s3 = inlined_call_operand.vmem [shape: f32[1,8], index: 3, kind: input, shape index: {}]
  %s4 = inlined_call_operand.vmem [shape: bf16[2,64,8], index: 4, kind: output, shape index: {0}]
  %s5 = inlined_call_operand.vmem [shape: f32[2,1,8], index: 5, kind: output, shape index: {1}]
  %6 = xla_tuple %s4, %s5
  %s7 = sld [smem:[#allocation0]]
  $region61: #{basic_block_forward.11} parent=0
    _
  %s9 = ssub.s32 1, %s7
  %s10 = scalar_select 0, %s9, %s7
  loop: start=0, step=1, limit=4
  $region2: #{basic_block_forward.11} parent=0 // loop_pre_header
    _
  $region3: #{basic_block_forward.11} parent=0 // loop_header
    %s12 = sphi 0, %s16
    %p13 = scmp.ge.s32.totalorder %s12, 4
    %s19 = sphi 0, %s31
    %s20 = sphi 0, %s27
    %s21 = sphi 0, %s19
    %s22 = sphi 0, %s20
    %s23 = sphi 0, %s21
    %s24 = sphi 0, %s22
    %s36 = sphi 0, %s38
    %s39 = sphi 0, %s36
    %s40 = sphi 0, %s39
    %s56 = sphi 0, %s40
    %s60 = sphi 0, %s60
    %s62 = sphi 0, %s60
    %s63 = sphi 0, %s62
    %s77 = sphi 0, %s63
    %s81 = sphi 0, %s81
    %s83 = sphi 0, %s81
    %s84 = sphi 0, %s83
    %s98 = sphi 0, %s84
    %s102 = sphi 0, %s102
    %s104 = sphi 0, %s102
    %s105 = sphi 0, %s104
    %s119 = sphi 0, %s105
    %s127 = sphi 0, %s129
    %s130 = sphi 0, %s127
    %s131 = sphi 0, %s130
    %s147 = sphi 0, %s131
    %s153 = sphi 0, %s155
    %s156 = sphi 0, %s153
    %s157 = sphi 0, %s156
    %s173 = sphi 0, %s157
  $region4: #{basic_block_forward.11} parent=0 // loop_header_branch
    %15 = sbr.rel (%p13) target = $region8
  $region5: #{basic_block_forward.11} parent=0 // loop_body
    %s17 = ssub.s32 %s12, 1
    %s18 = ssub.s32 %s12, 2
    %s25 = sadd.s32 1, %s20
    %p26 = scmp.ge.s32.totalorder %s25, 1
    %s27 = scalar_select %p26, 0, %s25
    %s28 = sadd.s32 1, %s19
    %s29 = scalar_select %p26, %s28, %s19
    %p30 = scmp.ge.s32.totalorder %s29, 2
    %s31 = scalar_select %p30, 0, %s29
    %s32 = ssub.s32 %s19, %s31
    %s33 = ssub.s32 %s20, %s27
    %s34 = sor.u32 %s32, %s33
    %p35 = scmp.eq.s32.totalorder %s34, 0
    %s37 = sadd.s32 %s36, 1
    %s38 = scalar_select %p35, %s36, %s37
    %p41 = pneg %p35
    %p42 = scmp.eq.s32.totalorder %s12, 1
    %p43 = por %p41, %p42
    %p44 = scmp.ne.s32.totalorder %s36, %s39
    %p45 = scmp.eq.s32.totalorder %s12, 0
    %p46 = por %p44, %p45
    %p47 = scmp.ne.s32.totalorder %s36, %s39
    %p48 = scmp.eq.s32.totalorder %s17, 1
    %p49 = por %p47, %p48
    %p50 = scmp.ne.s32.totalorder %s39, %s40
    %p51 = scmp.eq.s32.totalorder %s17, 0
    %p52 = por %p50, %p51
    %p53 = scmp.ne.s32.totalorder %s39, %s40
    %p54 = scmp.eq.s32.totalorder %s18, 1
    %p55 = por %p53, %p54
    %p57 = scmp.ne.s32.totalorder %s40, %s56
    %p58 = scmp.eq.s32.totalorder %s18, 0
    %p59 = por %p57, %p58
    %s61 = sadd.s32 %s60, 1
    %p64 = scmp.eq.s32.totalorder %s12, 1
    %p65 = scmp.ne.s32.totalorder %s60, %s62
    %p66 = scmp.eq.s32.totalorder %s12, 0
    %p67 = por %p65, %p66
    %p68 = scmp.ne.s32.totalorder %s60, %s62
    %p69 = scmp.eq.s32.totalorder %s17, 1
    %p70 = por %p68, %p69
    %p71 = scmp.ne.s32.totalorder %s62, %s63
    %p72 = scmp.eq.s32.totalorder %s17, 0
    %p73 = por %p71, %p72
    %p74 = scmp.ne.s32.totalorder %s62, %s63
    %p75 = scmp.eq.s32.totalorder %s18, 1
    %p76 = por %p74, %p75
    %p78 = scmp.ne.s32.totalorder %s63, %s77
    %p79 = scmp.eq.s32.totalorder %s18, 0
    %p80 = por %p78, %p79
    %s82 = sadd.s32 %s81, 1
    %p85 = scmp.eq.s32.totalorder %s12, 1
    %p86 = scmp.ne.s32.totalorder %s81, %s83
    %p87 = scmp.eq.s32.totalorder %s12, 0
    %p88 = por %p86, %p87
    %p89 = scmp.ne.s32.totalorder %s81, %s83
    %p90 = scmp.eq.s32.totalorder %s17, 1
    %p91 = por %p89, %p90
    %p92 = scmp.ne.s32.totalorder %s83, %s84
    %p93 = scmp.eq.s32.totalorder %s17, 0
    %p94 = por %p92, %p93
    %p95 = scmp.ne.s32.totalorder %s83, %s84
    %p96 = scmp.eq.s32.totalorder %s18, 1
    %p97 = por %p95, %p96
    %p99 = scmp.ne.s32.totalorder %s84, %s98
    %p100 = scmp.eq.s32.totalorder %s18, 0
    %p101 = por %p99, %p100
    %s103 = sadd.s32 %s102, 1
    %p106 = scmp.eq.s32.totalorder %s12, 1
    %p107 = scmp.ne.s32.totalorder %s102, %s104
    %p108 = scmp.eq.s32.totalorder %s12, 0
    %p109 = por %p107, %p108
    %p110 = scmp.ne.s32.totalorder %s102, %s104
    %p111 = scmp.eq.s32.totalorder %s17, 1
    %p112 = por %p110, %p111
    %p113 = scmp.ne.s32.totalorder %s104, %s105
    %p114 = scmp.eq.s32.totalorder %s17, 0
    %p115 = por %p113, %p114
    %p116 = scmp.ne.s32.totalorder %s104, %s105
    %p117 = scmp.eq.s32.totalorder %s18, 1
    %p118 = por %p116, %p117
    %p120 = scmp.ne.s32.totalorder %s105, %s119
    %p121 = scmp.eq.s32.totalorder %s18, 0
    %p122 = por %p120, %p121
    %s123 = ssub.s32 %s19, %s31
    %s124 = ssub.s32 %s20, %s27
    %s125 = sor.u32 %s123, %s124
    %p126 = scmp.eq.s32.totalorder %s125, 0
    %s128 = sadd.s32 %s127, 1
    %s129 = scalar_select %p126, %s127, %s128
    %p132 = pneg %p126
    %p133 = scmp.eq.s32.totalorder %s12, 1
    %p134 = por %p132, %p133
    %p135 = scmp.ne.s32.totalorder %s127, %s130
    %p136 = scmp.eq.s32.totalorder %s12, 0
    %p137 = por %p135, %p136
    %p138 = scmp.ne.s32.totalorder %s127, %s130
    %p139 = scmp.eq.s32.totalorder %s17, 1
    %p140 = por %p138, %p139
    %p141 = scmp.ne.s32.totalorder %s130, %s131
    %p142 = scmp.eq.s32.totalorder %s17, 0
    %p143 = por %p141, %p142
    %p144 = scmp.ne.s32.totalorder %s130, %s131
    %p145 = scmp.eq.s32.totalorder %s18, 1
    %p146 = por %p144, %p145
    %p148 = scmp.ne.s32.totalorder %s131, %s147
    %p149 = scmp.eq.s32.totalorder %s18, 0
    %p150 = por %p148, %p149
    %s151 = ssub.s32 %s19, %s31
    %p152 = scmp.eq.s32.totalorder %s151, 0
    %s154 = sadd.s32 %s153, 1
    %s155 = scalar_select %p152, %s153, %s154
    %p158 = pneg %p152
    %p159 = scmp.eq.s32.totalorder %s12, 1
    %p160 = por %p158, %p159
    %p161 = scmp.ne.s32.totalorder %s153, %s156
    %p162 = scmp.eq.s32.totalorder %s12, 0
    %p163 = por %p161, %p162
    %p164 = scmp.ne.s32.totalorder %s153, %s156
    %p165 = scmp.eq.s32.totalorder %s17, 1
    %p166 = por %p164, %p165
    %p167 = scmp.ne.s32.totalorder %s156, %s157
    %p168 = scmp.eq.s32.totalorder %s17, 0
    %p169 = por %p167, %p168
    %p170 = scmp.ne.s32.totalorder %s156, %s157
    %p171 = scmp.eq.s32.totalorder %s18, 1
    %p172 = por %p170, %p171
    %p174 = scmp.ne.s32.totalorder %s157, %s173
    %p175 = scmp.eq.s32.totalorder %s18, 0
    %p176 = por %p174, %p175
    %p177 = scmp.le.s32.totalorder 1, %s12
    %p178 = scmp.lt.s32.totalorder %s12, 3
    %p179 = pnand %p177, %p178
    %p180 = pneg %p179
    // Predicated region
    $region9: #{basic_block_forward.11} parent=5 // pred_check
      _
    $region10: #{basic_block_forward.11} parent=5 // pred_check_branch
      %182 = sbr.rel (%p179) target = $region12
    $region11: #{basic_block_forward.11} parent=5 // pred_region
      %s183 = ssub.s32 %s12, 1
      // Predicated region
      $region13: #{basic_block_forward.11} parent=11 // pred_check
        %p184 = pneg %p73
      $region14: #{basic_block_forward.11} parent=11 // pred_check_branch
        %186 = sbr.rel (%p184) target = $region16
      $region15: #{basic_block_forward.11} parent=11 // pred_region
        _
      $region16: #{basic_block_forward.11} parent=11 // pred_fallthru
        _
      // Predicated region
      $region17: #{basic_block_forward.11} parent=11 // pred_check
        %p187 = pneg %p94
      $region18: #{basic_block_forward.11} parent=11 // pred_check_branch
        %189 = sbr.rel (%p187) target = $region20
      $region19: #{basic_block_forward.11} parent=11 // pred_region
        _
      $region20: #{basic_block_forward.11} parent=11 // pred_fallthru
        _
      // Predicated region
      $region21: #{basic_block_forward.11} parent=11 // pred_check
        %p190 = pneg %p115
      $region22: #{basic_block_forward.11} parent=11 // pred_check_branch
        %192 = sbr.rel (%p190) target = $region24
      $region23: #{basic_block_forward.11} parent=11 // pred_region
        _
      $region24: #{basic_block_forward.11} parent=11 // pred_fallthru
        _
    $region12: #{basic_block_forward.11} parent=5 // pred_fallthru
      _
    %p193 = scmp.lt.s32.totalorder %s12, 2
    // Predicated region
    $region25: #{basic_block_forward.11} parent=5 // pred_check
      %p194 = pneg %p193
    $region26: #{basic_block_forward.11} parent=5 // pred_check_branch
      %196 = sbr.rel (%p194) target = $region28
    $region27: #{basic_block_forward.11} parent=5 // pred_region
      // Predicated region
      $region29: #{basic_block_forward.11} parent=27 // pred_check
        %p197 = pneg %p46
      $region30: #{basic_block_forward.11} parent=27 // pred_check_branch
        %199 = sbr.rel (%p197) target = $region32
      $region31: #{basic_block_forward.11} parent=27 // pred_region
        %s200 = smul.u32 8, %s20
        %p201 = scmp.lt.s32.totalorder %s19, 1
        %s202 = scalar_select %p201, %s19, 1
        %p203 = scmp.lt.s32.totalorder %s200, 7
        %s204 = scalar_select %p203, %s200, 7
        %s205 = smul.addr %s202, 8
        %s206 = sadd.s32 %s204, %s205
        %s207 = smul.addr %s206, 4
        %s208 = scalar_lea.vmem %s0, %s207
        %s209 = smul.u32 8, %s20
      $region32: #{basic_block_forward.11} parent=27 // pred_fallthru
        _
    $region28: #{basic_block_forward.11} parent=5 // pred_fallthru
      _
    %p210 = scmp.le.s32.totalorder 1, %s12
    %p211 = scmp.lt.s32.totalorder %s12, 3
    %p212 = pnand %p210, %p211
    %p213 = pneg %p212
    // Predicated region
    $region33: #{basic_block_forward.11} parent=5 // pred_check
      _
    $region34: #{basic_block_forward.11} parent=5 // pred_check_branch
      %215 = sbr.rel (%p212) target = $region36
    $region35: #{basic_block_forward.11} parent=5 // pred_region
      %s216 = ssub.s32 %s12, 1
      %s217 = smul.u32 8, %s22
      %p218 = scmp.lt.s32.totalorder %s21, 1
      %s219 = scalar_select %p218, %s21, 1
      %p220 = scmp.lt.s32.totalorder %s217, 7
      %s221 = scalar_select %p220, %s217, 7
      %s222 = smul.addr %s219, 8
      %s223 = sadd.s32 %s221, %s222
      %s224 = smul.addr %s223, 4
      %s225 = scalar_lea.vmem %s0, %s224
      %p226 = pneg %p52
      %p227 = pneg %p49
      %p228 = pneg %p73
      %p229 = pneg %p70
      %p230 = pneg %p94
      %p231 = pneg %p91
      %p232 = pneg %p115
      %p233 = pneg %p112
      %p234 = pneg %p143
      %p235 = pneg %p140
      %s236 = smul.u32 8, %s22
      %p237 = scmp.lt.s32.totalorder %s21, 1
      %s238 = scalar_select %p237, %s21, 1
      %p239 = scmp.lt.s32.totalorder %s236, 7
      %s240 = scalar_select %p239, %s236, 7
      %s241 = smul.addr %s238, 8
      %s242 = sadd.s32 %s240, %s241
      %s243 = smul.addr %s242, 4
      %s244 = scalar_lea.vmem %s4, %s243
      %p245 = pneg %p169
      %p246 = pneg %p166
      %p247 = scmp.lt.s32.totalorder %s21, 1
      %s248 = scalar_select %p247, %s21, 1
      %s249 = scalar_lea.vmem %s5, %s248
      %s250 = smul.u32 8, %s22
      %p251 = scmp.lt.s32.totalorder %s21, 1
      %s252 = scalar_select %p251, %s21, 1
      %p253 = scmp.lt.s32.totalorder %s250, 7
      %s254 = scalar_select %p253, %s250, 7
      %s255 = smul.addr %s252, 8
      %s256 = sadd.s32 %s254, %s255
      %s257 = smul.addr %s256, 4
      %s258 = scalar_lea.vmem %s0, %s257
      %s259 = smul.u32 8, %s22
      %s260 = smul.u32 8, %s22
      %p261 = scmp.lt.s32.totalorder %s21, 1
      %s262 = scalar_select %p261, %s21, 1
      %p263 = scmp.lt.s32.totalorder %s260, 7
      %s264 = scalar_select %p263, %s260, 7
      %s265 = smul.addr %s262, 8
      %s266 = sadd.s32 %s264, %s265
      %s267 = smul.addr %s266, 4
      %s268 = scalar_lea.vmem %s4, %s267
      %s269 = smul.u32 8, %s22
      %p270 = scmp.lt.s32.totalorder %s21, 1
      %s271 = scalar_select %p270, %s21, 1
      %s272 = scalar_lea.vmem %s5, %s271
      %p274 = scmp.eq.s32.totalorder %s22, 0
      // Predicated region
      $region37: #{basic_block_forward.11} parent=35 // pred_check
        %p275 = pneg %p274
      $region38: #{basic_block_forward.11} parent=35 // pred_check_branch
        %277 = sbr.rel (%p275) target = $region40
      $region39: #{basic_block_forward.11} parent=35 // pred_region
        %vm278 = vcmask 57344
        %279 = vst.msk [vmem:[%s272] sm:$0x1] %vm278, 0.0
      $region40: #{basic_block_forward.11} parent=35 // pred_fallthru
        _
      %v280 = vld [vmem:[%s258] sm:$0xf]
      %v281 = vld [vmem:[%s258 + $0x4] sm:$0xf]
      %v282 = vld [vmem:[%s258 + $0x8] sm:$0xf]
      %v283 = vld [vmem:[%s258 + $0xc] sm:$0xf]
      %v284 = vld [vmem:[%s258 + $0x10] sm:$0xf]
      %v285 = vld [vmem:[%s258 + $0x14] sm:$0xf]
      %v286 = vld [vmem:[%s258 + $0x18] sm:$0xf]
      %v287 = vld [vmem:[%s258 + $0x1c] sm:$0xf]
      %v288 = vld [vmem:[%s1] sm:$0xf]
      %v289 = vld [vmem:[%s1 + $0x4] sm:$0xf]
      %v290 = vld [vmem:[%s1 + $0x8] sm:$0xf]
      %v291 = vld [vmem:[%s1 + $0xc] sm:$0xf]
      %v292 = vld [vmem:[%s1 + $0x10] sm:$0xf]
      %v293 = vld [vmem:[%s1 + $0x14] sm:$0xf]
      %v294 = vld [vmem:[%s1 + $0x18] sm:$0xf]
      %v295 = vld [vmem:[%s1 + $0x1c] sm:$0xf]
      %v296 = vld [vmem:[%s1 + $0x20] sm:$0xf]
      %v305 = vunpack.c.l.b16 %v280
      %v306 = vunpack.c.l.b16 %v281
      %v307 = vunpack.c.l.b16 %v282
      %v308 = vunpack.c.l.b16 %v283
      %v309 = vunpack.c.l.b16 %v284
      %v310 = vunpack.c.l.b16 %v285
      %v311 = vunpack.c.l.b16 %v286
      %v312 = vunpack.c.l.b16 %v287
      %v313 = vpack.c.b16 %v306, %v305
      %v314 = vpack.c.b16 %v308, %v307
      %v315 = vpack.c.b16 %v310, %v309
      %v316 = vpack.c.b16 %v312, %v311
      %v326 = vunpack.c.l.b16 %v288
      %v327 = vunpack.c.l.b16 %v289
      %v328 = vunpack.c.l.b16 %v290
      %v329 = vunpack.c.l.b16 %v291
      %v330 = vunpack.c.l.b16 %v292
      %v331 = vunpack.c.l.b16 %v293
      %v332 = vunpack.c.l.b16 %v294
      %v333 = vunpack.c.l.b16 %v295
      %v334 = vunpack.c.l.b16 %v296
      %v335 = vpack.c.b16 %v327, %v326
      %v336 = vpack.c.b16 %v329, %v328
      %v337 = vpack.c.b16 %v331, %v330
      %v338 = vpack.c.b16 %v333, %v332
      %v339 = vpack.c.b16 %v334, %v334
      %vm344 = vcmask 588800
      %v346 = vsel %vm344, %v313, 0
      %v349 = vsel %vm344, %v314, 0
      %v352 = vsel %vm344, %v315, 0
      %v355 = vsel %vm344, %v316, 0
      %vm357 = vcmask 1043456
      %v359 = vsel %vm357, %v339, 0
      %361 = vmatpush.bf16.msra.mxu0 0
      %362 = vmatpush.bf16.msra.mxu0 0
      %363 = vmatpush.bf16.msra.mxu0 0
      %364 = vmatpush.bf16.msra.mxu0 %v359
      %365 = vmatpush.bf16.msra.mxu0 %v338
      %366 = vmatpush.bf16.msra.mxu0 %v337
      %367 = vmatpush.bf16.msra.mxu0 %v336
      %368 = vmatpush.bf16.msra.mxu0 %v335
      %369 = vmatmul.bf16.gmra.mxu0 %v346
      %v370 = vpop.f32.mrf.mxu0
      %v371 = vadd.f32 0.0, %v370
      %v372 = vpop.f32.mrf.mxu0
      %v373 = vadd.f32 0.0, %v372
      %374 = vmatmul.bf16.gmra.mxu0 %v349
      %v375 = vpop.f32.mrf.mxu0
      %v376 = vadd.f32 0.0, %v375
      %v377 = vpop.f32.mrf.mxu0
      %v378 = vadd.f32 0.0, %v377
      %379 = vmatmul.bf16.gmra.mxu0 %v352
      %v380 = vpop.f32.mrf.mxu0
      %v381 = vadd.f32 0.0, %v380
      %v382 = vpop.f32.mrf.mxu0
      %v383 = vadd.f32 0.0, %v382
      %384 = vmatmul.bf16.gmra.mxu0 %v355
      %v385 = vpop.f32.mrf.mxu0
      %v386 = vadd.f32 0.0, %v385
      %v387 = vpop.f32.mrf.mxu0
      %v388 = vadd.f32 0.0, %v387
      %389 = vdwg.mxu0
      %v390 = vld [vmem:[%s2] sm:$0x1]
      %v392 = vperm.slane %v390, 0
      %v394 = vmul.f32 %v371, %v392
      %v395 = vmul.f32 %v373, %v392
      %v396 = vmul.f32 %v376, %v392
      %v397 = vmul.f32 %v378, %v392
      %v398 = vmul.f32 %v381, %v392
      %v399 = vmul.f32 %v383, %v392
      %v400 = vmul.f32 %v386, %v392
      %v401 = vmul.f32 %v388, %v392
      %v402 = vld [vmem:[%s3] sm:$0x1]
      %v404 = vperm.slane %v402, 0
      %v406 = vadd.f32 %v394, %v404
      %v407 = vadd.f32 %v395, %v404
      %v408 = vadd.f32 %v396, %v404
      %v409 = vadd.f32 %v397, %v404
      %v410 = vadd.f32 %v398, %v404
      %v411 = vadd.f32 %v399, %v404
      %v412 = vadd.f32 %v400, %v404
      %v413 = vadd.f32 %v401, %v404
      %v414 = vpack.c.bf16 %v406, %v406
      %v415 = vpack.c.bf16 %v407, %v407
      %v416 = vpack.c.bf16 %v408, %v408
      %v417 = vpack.c.bf16 %v409, %v409
      %v418 = vpack.c.bf16 %v410, %v410
      %v419 = vpack.c.bf16 %v411, %v411
      %v420 = vpack.c.bf16 %v412, %v412
      %v421 = vpack.c.bf16 %v413, %v413
      %vm422 = vcmask 60416
      %423 = vst.msk [vmem:[%s268] sm:$0xf] %vm422, %v414
      %424 = vst.msk [vmem:[%s268 + $0x4] sm:$0xf] %vm422, %v415
      %425 = vst.msk [vmem:[%s268 + $0x8] sm:$0xf] %vm422, %v416
      %426 = vst.msk [vmem:[%s268 + $0xc] sm:$0xf] %vm422, %v417
      %427 = vst.msk [vmem:[%s268 + $0x10] sm:$0xf] %vm422, %v418
      %428 = vst.msk [vmem:[%s268 + $0x14] sm:$0xf] %vm422, %v419
      %429 = vst.msk [vmem:[%s268 + $0x18] sm:$0xf] %vm422, %v420
      %430 = vst.msk [vmem:[%s268 + $0x1c] sm:$0xf] %vm422, %v421
      %v431 = vld [vmem:[%s272] sm:$0x1]
      %vm432 = vcmask 64512
      %v433 = vsel %vm432, %v406, 0.0
      %v434 = vsel %vm432, %v407, 0.0
      %v435 = vadd.f32 %v433, %v434
      %v436 = vsel %vm432, %v408, 0.0
      %v437 = vadd.f32 %v435, %v436
      %v438 = vsel %vm432, %v409, 0.0
      %v439 = vadd.f32 %v437, %v438
      %v440 = vsel %vm432, %v410, 0.0
      %v441 = vadd.f32 %v439, %v440
      %v442 = vsel %vm432, %v411, 0.0
      %v443 = vadd.f32 %v441, %v442
      %v444 = vsel %vm432, %v412, 0.0
      %v445 = vadd.f32 %v443, %v444
      %v446 = vsel %vm432, %v413, 0.0
      %v447 = vadd.f32 %v445, %v446
      %v448 = vrot.slane %v447, 4
      %v449 = vadd.f32 %v447, %v448
      %v450 = vrot.slane %v449, 2
      %v451 = vadd.f32 %v449, %v450
      %v452 = vrot.slane %v451, 1
      %v453 = vadd.f32 %v451, %v452
      %v454 = vadd.f32 %v431, %v453
      %vm455 = vcmask 57344
      %456 = vst.msk [vmem:[%s272] sm:$0x1] %vm455, %v454
      %s457 = smul.u32 8, %s22
      %p458 = scmp.lt.s32.totalorder %s21, 1
      %s459 = scalar_select %p458, %s21, 1
      %p460 = scmp.lt.s32.totalorder %s457, 7
      %s461 = scalar_select %p460, %s457, 7
      %s462 = smul.addr %s459, 8
      %s463 = sadd.s32 %s461, %s462
      %s464 = smul.addr %s463, 4
      %s465 = scalar_lea.vmem %s4, %s464
      %p466 = scmp.lt.s32.totalorder %s21, 1
      %s467 = scalar_select %p466, %s21, 1
      %s468 = scalar_lea.vmem %s5, %s467
      // Predicated region
      $region41: #{basic_block_forward.11} parent=35 // pred_check
        %p469 = pneg %p140
      $region42: #{basic_block_forward.11} parent=35 // pred_check_branch
        %471 = sbr.rel (%p469) target = $region44
      $region43: #{basic_block_forward.11} parent=35 // pred_region
        %s472 = smul.u32 8, %s22
      $region44: #{basic_block_forward.11} parent=35 // pred_fallthru
        _
      // Predicated region
      $region45: #{basic_block_forward.11} parent=35 // pred_check
        %p473 = pneg %p166
      $region46: #{basic_block_forward.11} parent=35 // pred_check_branch
        %475 = sbr.rel (%p473) target = $region48
      $region47: #{basic_block_forward.11} parent=35 // pred_region
        _
      $region48: #{basic_block_forward.11} parent=35 // pred_fallthru
        _
    $region36: #{basic_block_forward.11} parent=5 // pred_fallthru
      _
    %p476 = scmp.le.s32.totalorder 2, %s12
    // Predicated region
    $region49: #{basic_block_forward.11} parent=5 // pred_check
      %p477 = pneg %p476
    $region50: #{basic_block_forward.11} parent=5 // pred_check_branch
      %479 = sbr.rel (%p477) target = $region52
    $region51: #{basic_block_forward.11} parent=5 // pred_region
      %s480 = ssub.s32 %s12, 2
      // Predicated region
      $region53: #{basic_block_forward.11} parent=51 // pred_check
        %p481 = pneg %p146
      $region54: #{basic_block_forward.11} parent=51 // pred_check_branch
        %483 = sbr.rel (%p481) target = $region56
      $region55: #{basic_block_forward.11} parent=51 // pred_region
        %s484 = smul.u32 8, %s24
        %p485 = scmp.lt.s32.totalorder %s23, 1
        %s486 = scalar_select %p485, %s23, 1
        %p487 = scmp.lt.s32.totalorder %s484, 7
        %s488 = scalar_select %p487, %s484, 7
        %s489 = smul.addr %s486, 8
        %s490 = sadd.s32 %s488, %s489
        %s491 = smul.addr %s490, 4
        %s492 = scalar_lea.vmem %s4, %s491
      $region56: #{basic_block_forward.11} parent=51 // pred_fallthru
        _
      // Predicated region
      $region57: #{basic_block_forward.11} parent=51 // pred_check
        %p493 = pneg %p172
      $region58: #{basic_block_forward.11} parent=51 // pred_check_branch
        %495 = sbr.rel (%p493) target = $region60
      $region59: #{basic_block_forward.11} parent=51 // pred_region
        %p496 = scmp.lt.s32.totalorder %s23, 1
        %s497 = scalar_select %p496, %s23, 1
        %s498 = scalar_lea.vmem %s5, %s497
      $region60: #{basic_block_forward.11} parent=51 // pred_fallthru
        _
    $region52: #{basic_block_forward.11} parent=5 // pred_fallthru
      _
  $region6: #{basic_block_forward.11} parent=0 // loop_footer
    %s16 = sadd.s32 1, %s12
  $region7: #{basic_block_forward.11} parent=0 // loop_footer_branch
    %11 = sbr.rel target = $region3
  $region8: #{basic_block_forward.11} parent=0 // loop_exit
    _

// kernel: basic_block_forward.15
$region0: #{basic_block_forward.15}
  #allocation0 [shape = 'u32[]', space=smem, size = 0x4, offset = 0x4, fixed_abs, tag = 'smem constant byte address 0x4 - core index']
  #allocation1 [shape = 'u32[72,128]{1,0:T(1,128)}', space=vmem, size = 0x9000, scoped, tag = 'internal scratch']
  %s0 = inlined_call_operand.vmem [shape: bf16[2,64,8], index: 0, kind: input, shape index: {}]
  %s1 = inlined_call_operand.vmem [shape: bf16[2,64,8], index: 1, kind: input, shape index: {}]
  %s2 = inlined_call_operand.vmem [shape: bf16[2,64,8], index: 2, kind: input, shape index: {}]
  %s3 = inlined_call_operand.vmem [shape: f32[2,1,8], index: 3, kind: input, shape index: {}]
  %s4 = inlined_call_operand.vmem [shape: f32[2,1,8], index: 4, kind: input, shape index: {}]
  %s5 = inlined_call_operand.vmem [shape: f32[2,64,8], index: 5, kind: output, shape index: {}]
  %s6 = sld [smem:[#allocation0]]
  $region53: #{basic_block_forward.15} parent=0
    _
  %s8 = ssub.s32 1, %s6
  %s9 = scalar_select 0, %s8, %s6
  loop: start=0, step=1, limit=4
  $region2: #{basic_block_forward.15} parent=0 // loop_pre_header
    _
  $region3: #{basic_block_forward.15} parent=0 // loop_header
    %s11 = sphi 0, %s15
    %p12 = scmp.ge.s32.totalorder %s11, 4
    %s18 = sphi 0, %s30
    %s19 = sphi 0, %s26
    %s20 = sphi 0, %s18
    %s21 = sphi 0, %s19
    %s22 = sphi 0, %s20
    %s23 = sphi 0, %s21
    %s35 = sphi 0, %s37
    %s38 = sphi 0, %s35
    %s39 = sphi 0, %s38
    %s55 = sphi 0, %s39
    %s63 = sphi 0, %s65
    %s66 = sphi 0, %s63
    %s67 = sphi 0, %s66
    %s83 = sphi 0, %s67
    %s91 = sphi 0, %s93
    %s94 = sphi 0, %s91
    %s95 = sphi 0, %s94
    %s111 = sphi 0, %s95
    %s117 = sphi 0, %s119
    %s120 = sphi 0, %s117
    %s121 = sphi 0, %s120
    %s137 = sphi 0, %s121
    %s143 = sphi 0, %s145
    %s146 = sphi 0, %s143
    %s147 = sphi 0, %s146
    %s163 = sphi 0, %s147
    %s171 = sphi 0, %s173
    %s174 = sphi 0, %s171
    %s175 = sphi 0, %s174
    %s191 = sphi 0, %s175
  $region4: #{basic_block_forward.15} parent=0 // loop_header_branch
    %14 = sbr.rel (%p12) target = $region8
  $region5: #{basic_block_forward.15} parent=0 // loop_body
    %s16 = ssub.s32 %s11, 1
    %s17 = ssub.s32 %s11, 2
    %s24 = sadd.s32 1, %s19
    %p25 = scmp.ge.s32.totalorder %s24, 1
    %s26 = scalar_select %p25, 0, %s24
    %s27 = sadd.s32 1, %s18
    %s28 = scalar_select %p25, %s27, %s18
    %p29 = scmp.ge.s32.totalorder %s28, 2
    %s30 = scalar_select %p29, 0, %s28
    %s31 = ssub.s32 %s18, %s30
    %s32 = ssub.s32 %s19, %s26
    %s33 = sor.u32 %s31, %s32
    %p34 = scmp.eq.s32.totalorder %s33, 0
    %s36 = sadd.s32 %s35, 1
    %s37 = scalar_select %p34, %s35, %s36
    %p40 = pneg %p34
    %p41 = scmp.eq.s32.totalorder %s11, 1
    %p42 = por %p40, %p41
    %p43 = scmp.ne.s32.totalorder %s35, %s38
    %p44 = scmp.eq.s32.totalorder %s11, 0
    %p45 = por %p43, %p44
    %p46 = scmp.ne.s32.totalorder %s35, %s38
    %p47 = scmp.eq.s32.totalorder %s16, 1
    %p48 = por %p46, %p47
    %p49 = scmp.ne.s32.totalorder %s38, %s39
    %p50 = scmp.eq.s32.totalorder %s16, 0
    %p51 = por %p49, %p50
    %p52 = scmp.ne.s32.totalorder %s38, %s39
    %p53 = scmp.eq.s32.totalorder %s17, 1
    %p54 = por %p52, %p53
    %p56 = scmp.ne.s32.totalorder %s39, %s55
    %p57 = scmp.eq.s32.totalorder %s17, 0
    %p58 = por %p56, %p57
    %s59 = ssub.s32 %s18, %s30
    %s60 = ssub.s32 %s19, %s26
    %s61 = sor.u32 %s59, %s60
    %p62 = scmp.eq.s32.totalorder %s61, 0
    %s64 = sadd.s32 %s63, 1
    %s65 = scalar_select %p62, %s63, %s64
    %p68 = pneg %p62
    %p69 = scmp.eq.s32.totalorder %s11, 1
    %p70 = por %p68, %p69
    %p71 = scmp.ne.s32.totalorder %s63, %s66
    %p72 = scmp.eq.s32.totalorder %s11, 0
    %p73 = por %p71, %p72
    %p74 = scmp.ne.s32.totalorder %s63, %s66
    %p75 = scmp.eq.s32.totalorder %s16, 1
    %p76 = por %p74, %p75
    %p77 = scmp.ne.s32.totalorder %s66, %s67
    %p78 = scmp.eq.s32.totalorder %s16, 0
    %p79 = por %p77, %p78
    %p80 = scmp.ne.s32.totalorder %s66, %s67
    %p81 = scmp.eq.s32.totalorder %s17, 1
    %p82 = por %p80, %p81
    %p84 = scmp.ne.s32.totalorder %s67, %s83
    %p85 = scmp.eq.s32.totalorder %s17, 0
    %p86 = por %p84, %p85
    %s87 = ssub.s32 %s18, %s30
    %s88 = ssub.s32 %s19, %s26
    %s89 = sor.u32 %s87, %s88
    %p90 = scmp.eq.s32.totalorder %s89, 0
    %s92 = sadd.s32 %s91, 1
    %s93 = scalar_select %p90, %s91, %s92
    %p96 = pneg %p90
    %p97 = scmp.eq.s32.totalorder %s11, 1
    %p98 = por %p96, %p97
    %p99 = scmp.ne.s32.totalorder %s91, %s94
    %p100 = scmp.eq.s32.totalorder %s11, 0
    %p101 = por %p99, %p100
    %p102 = scmp.ne.s32.totalorder %s91, %s94
    %p103 = scmp.eq.s32.totalorder %s16, 1
    %p104 = por %p102, %p103
    %p105 = scmp.ne.s32.totalorder %s94, %s95
    %p106 = scmp.eq.s32.totalorder %s16, 0
    %p107 = por %p105, %p106
    %p108 = scmp.ne.s32.totalorder %s94, %s95
    %p109 = scmp.eq.s32.totalorder %s17, 1
    %p110 = por %p108, %p109
    %p112 = scmp.ne.s32.totalorder %s95, %s111
    %p113 = scmp.eq.s32.totalorder %s17, 0
    %p114 = por %p112, %p113
    %s115 = ssub.s32 %s18, %s30
    %p116 = scmp.eq.s32.totalorder %s115, 0
    %s118 = sadd.s32 %s117, 1
    %s119 = scalar_select %p116, %s117, %s118
    %p122 = pneg %p116
    %p123 = scmp.eq.s32.totalorder %s11, 1
    %p124 = por %p122, %p123
    %p125 = scmp.ne.s32.totalorder %s117, %s120
    %p126 = scmp.eq.s32.totalorder %s11, 0
    %p127 = por %p125, %p126
    %p128 = scmp.ne.s32.totalorder %s117, %s120
    %p129 = scmp.eq.s32.totalorder %s16, 1
    %p130 = por %p128, %p129
    %p131 = scmp.ne.s32.totalorder %s120, %s121
    %p132 = scmp.eq.s32.totalorder %s16, 0
    %p133 = por %p131, %p132
    %p134 = scmp.ne.s32.totalorder %s120, %s121
    %p135 = scmp.eq.s32.totalorder %s17, 1
    %p136 = por %p134, %p135
    %p138 = scmp.ne.s32.totalorder %s121, %s137
    %p139 = scmp.eq.s32.totalorder %s17, 0
    %p140 = por %p138, %p139
    %s141 = ssub.s32 %s18, %s30
    %p142 = scmp.eq.s32.totalorder %s141, 0
    %s144 = sadd.s32 %s143, 1
    %s145 = scalar_select %p142, %s143, %s144
    %p148 = pneg %p142
    %p149 = scmp.eq.s32.totalorder %s11, 1
    %p150 = por %p148, %p149
    %p151 = scmp.ne.s32.totalorder %s143, %s146
    %p152 = scmp.eq.s32.totalorder %s11, 0
    %p153 = por %p151, %p152
    %p154 = scmp.ne.s32.totalorder %s143, %s146
    %p155 = scmp.eq.s32.totalorder %s16, 1
    %p156 = por %p154, %p155
    %p157 = scmp.ne.s32.totalorder %s146, %s147
    %p158 = scmp.eq.s32.totalorder %s16, 0
    %p159 = por %p157, %p158
    %p160 = scmp.ne.s32.totalorder %s146, %s147
    %p161 = scmp.eq.s32.totalorder %s17, 1
    %p162 = por %p160, %p161
    %p164 = scmp.ne.s32.totalorder %s147, %s163
    %p165 = scmp.eq.s32.totalorder %s17, 0
    %p166 = por %p164, %p165
    %s167 = ssub.s32 %s18, %s30
    %s168 = ssub.s32 %s19, %s26
    %s169 = sor.u32 %s167, %s168
    %p170 = scmp.eq.s32.totalorder %s169, 0
    %s172 = sadd.s32 %s171, 1
    %s173 = scalar_select %p170, %s171, %s172
    %p176 = pneg %p170
    %p177 = scmp.eq.s32.totalorder %s11, 1
    %p178 = por %p176, %p177
    %p179 = scmp.ne.s32.totalorder %s171, %s174
    %p180 = scmp.eq.s32.totalorder %s11, 0
    %p181 = por %p179, %p180
    %p182 = scmp.ne.s32.totalorder %s171, %s174
    %p183 = scmp.eq.s32.totalorder %s16, 1
    %p184 = por %p182, %p183
    %p185 = scmp.ne.s32.totalorder %s174, %s175
    %p186 = scmp.eq.s32.totalorder %s16, 0
    %p187 = por %p185, %p186
    %p188 = scmp.ne.s32.totalorder %s174, %s175
    %p189 = scmp.eq.s32.totalorder %s17, 1
    %p190 = por %p188, %p189
    %p192 = scmp.ne.s32.totalorder %s175, %s191
    %p193 = scmp.eq.s32.totalorder %s17, 0
    %p194 = por %p192, %p193
    %p195 = scmp.le.s32.totalorder 1, %s11
    %p196 = scmp.lt.s32.totalorder %s11, 3
    %p197 = pnand %p195, %p196
    %p198 = pneg %p197
    // Predicated region
    $region9: #{basic_block_forward.15} parent=5 // pred_check
      _
    $region10: #{basic_block_forward.15} parent=5 // pred_check_branch
      %200 = sbr.rel (%p197) target = $region12
    $region11: #{basic_block_forward.15} parent=5 // pred_region
      %s201 = ssub.s32 %s11, 1
    $region12: #{basic_block_forward.15} parent=5 // pred_fallthru
      _
    %p202 = scmp.lt.s32.totalorder %s11, 2
    // Predicated region
    $region13: #{basic_block_forward.15} parent=5 // pred_check
      %p203 = pneg %p202
    $region14: #{basic_block_forward.15} parent=5 // pred_check_branch
      %205 = sbr.rel (%p203) target = $region16
    $region15: #{basic_block_forward.15} parent=5 // pred_region
      // Predicated region
      $region17: #{basic_block_forward.15} parent=15 // pred_check
        %p206 = pneg %p45
      $region18: #{basic_block_forward.15} parent=15 // pred_check_branch
        %208 = sbr.rel (%p206) target = $region20
      $region19: #{basic_block_forward.15} parent=15 // pred_region
        %s209 = smul.u32 8, %s19
        %p210 = scmp.lt.s32.totalorder %s18, 1
        %s211 = scalar_select %p210, %s18, 1
        %p212 = scmp.lt.s32.totalorder %s209, 7
        %s213 = scalar_select %p212, %s209, 7
        %s214 = smul.addr %s211, 8
        %s215 = sadd.s32 %s213, %s214
        %s216 = smul.addr %s215, 4
        %s217 = scalar_lea.vmem %s0, %s216
        %s218 = smul.u32 8, %s19
      $region20: #{basic_block_forward.15} parent=15 // pred_fallthru
        _
      // Predicated region
      $region21: #{basic_block_forward.15} parent=15 // pred_check
        %p219 = pneg %p73
      $region22: #{basic_block_forward.15} parent=15 // pred_check_branch
        %221 = sbr.rel (%p219) target = $region24
      $region23: #{basic_block_forward.15} parent=15 // pred_region
        %s222 = smul.u32 8, %s19
        %p223 = scmp.lt.s32.totalorder %s18, 1
        %s224 = scalar_select %p223, %s18, 1
        %p225 = scmp.lt.s32.totalorder %s222, 7
        %s226 = scalar_select %p225, %s222, 7
        %s227 = smul.addr %s224, 8
        %s228 = sadd.s32 %s226, %s227
        %s229 = smul.addr %s228, 4
        %s230 = scalar_lea.vmem %s1, %s229
        %s231 = smul.u32 8, %s19
      $region24: #{basic_block_forward.15} parent=15 // pred_fallthru
        _
      // Predicated region
      $region25: #{basic_block_forward.15} parent=15 // pred_check
        %p232 = pneg %p101
      $region26: #{basic_block_forward.15} parent=15 // pred_check_branch
        %234 = sbr.rel (%p232) target = $region28
      $region27: #{basic_block_forward.15} parent=15 // pred_region
        %s235 = smul.u32 8, %s19
        %p236 = scmp.lt.s32.totalorder %s18, 1
        %s237 = scalar_select %p236, %s18, 1
        %p238 = scmp.lt.s32.totalorder %s235, 7
        %s239 = scalar_select %p238, %s235, 7
        %s240 = smul.addr %s237, 8
        %s241 = sadd.s32 %s239, %s240
        %s242 = smul.addr %s241, 4
        %s243 = scalar_lea.vmem %s2, %s242
        %s244 = smul.u32 8, %s19
      $region28: #{basic_block_forward.15} parent=15 // pred_fallthru
        _
      // Predicated region
      $region29: #{basic_block_forward.15} parent=15 // pred_check
        %p245 = pneg %p127
      $region30: #{basic_block_forward.15} parent=15 // pred_check_branch
        %247 = sbr.rel (%p245) target = $region32
      $region31: #{basic_block_forward.15} parent=15 // pred_region
        %p248 = scmp.lt.s32.totalorder %s18, 1
        %s249 = scalar_select %p248, %s18, 1
        %s250 = scalar_lea.vmem %s3, %s249
      $region32: #{basic_block_forward.15} parent=15 // pred_fallthru
        _
      // Predicated region
      $region33: #{basic_block_forward.15} parent=15 // pred_check
        %p251 = pneg %p153
      $region34: #{basic_block_forward.15} parent=15 // pred_check_branch
        %253 = sbr.rel (%p251) target = $region36
      $region35: #{basic_block_forward.15} parent=15 // pred_region
        %p254 = scmp.lt.s32.totalorder %s18, 1
        %s255 = scalar_select %p254, %s18, 1
        %s256 = scalar_lea.vmem %s4, %s255
      $region36: #{basic_block_forward.15} parent=15 // pred_fallthru
        _
    $region16: #{basic_block_forward.15} parent=5 // pred_fallthru
      _
    %p257 = scmp.le.s32.totalorder 1, %s11
    %p258 = scmp.lt.s32.totalorder %s11, 3
    %p259 = pnand %p257, %p258
    %p260 = pneg %p259
    // Predicated region
    $region37: #{basic_block_forward.15} parent=5 // pred_check
      _
    $region38: #{basic_block_forward.15} parent=5 // pred_check_branch
      %262 = sbr.rel (%p259) target = $region40
    $region39: #{basic_block_forward.15} parent=5 // pred_region
      %s263 = ssub.s32 %s11, 1
      %s264 = smul.u32 8, %s21
      %p265 = scmp.lt.s32.totalorder %s20, 1
      %s266 = scalar_select %p265, %s20, 1
      %p267 = scmp.lt.s32.totalorder %s264, 7
      %s268 = scalar_select %p267, %s264, 7
      %s269 = smul.addr %s266, 8
      %s270 = sadd.s32 %s268, %s269
      %s271 = smul.addr %s270, 4
      %s272 = scalar_lea.vmem %s0, %s271
      %p273 = pneg %p51
      %p274 = pneg %p48
      %s275 = smul.u32 8, %s21
      %p276 = scmp.lt.s32.totalorder %s20, 1
      %s277 = scalar_select %p276, %s20, 1
      %p278 = scmp.lt.s32.totalorder %s275, 7
      %s279 = scalar_select %p278, %s275, 7
      %s280 = smul.addr %s277, 8
      %s281 = sadd.s32 %s279, %s280
      %s282 = smul.addr %s281, 4
      %s283 = scalar_lea.vmem %s1, %s282
      %p284 = pneg %p79
      %p285 = pneg %p76
      %s286 = smul.u32 8, %s21
      %p287 = scmp.lt.s32.totalorder %s20, 1
      %s288 = scalar_select %p287, %s20, 1
      %p289 = scmp.lt.s32.totalorder %s286, 7
      %s290 = scalar_select %p289, %s286, 7
      %s291 = smul.addr %s288, 8
      %s292 = sadd.s32 %s290, %s291
      %s293 = smul.addr %s292, 4
      %s294 = scalar_lea.vmem %s2, %s293
      %p295 = pneg %p107
      %p296 = pneg %p104
      %p297 = scmp.lt.s32.totalorder %s20, 1
      %s298 = scalar_select %p297, %s20, 1
      %s299 = scalar_lea.vmem %s3, %s298
      %p300 = pneg %p133
      %p301 = pneg %p130
      %p302 = scmp.lt.s32.totalorder %s20, 1
      %s303 = scalar_select %p302, %s20, 1
      %s304 = scalar_lea.vmem %s4, %s303
      %p305 = pneg %p159
      %p306 = pneg %p156
      %p307 = pneg %p187
      %p308 = pneg %p184
      %s309 = smul.u32 8, %s21
      %p310 = scmp.lt.s32.totalorder %s20, 1
      %s311 = scalar_select %p310, %s20, 1
      %p312 = scmp.lt.s32.totalorder %s309, 7
      %s313 = scalar_select %p312, %s309, 7
      %s314 = smul.addr %s311, 8
      %s315 = sadd.s32 %s313, %s314
      %s316 = smul.addr %s315, 8
      %s317 = scalar_lea.vmem %s5, %s316
      %s318 = smul.u32 8, %s21
      %p319 = scmp.lt.s32.totalorder %s20, 1
      %s320 = scalar_select %p319, %s20, 1
      %p321 = scmp.lt.s32.totalorder %s318, 7
      %s322 = scalar_select %p321, %s318, 7
      %s323 = smul.addr %s320, 8
      %s324 = sadd.s32 %s322, %s323
      %s325 = smul.addr %s324, 4
      %s326 = scalar_lea.vmem %s0, %s325
      %s327 = smul.u32 8, %s21
      %s328 = smul.u32 8, %s21
      %p329 = scmp.lt.s32.totalorder %s20, 1
      %s330 = scalar_select %p329, %s20, 1
      %p331 = scmp.lt.s32.totalorder %s328, 7
      %s332 = scalar_select %p331, %s328, 7
      %s333 = smul.addr %s330, 8
      %s334 = sadd.s32 %s332, %s333
      %s335 = smul.addr %s334, 4
      %s336 = scalar_lea.vmem %s1, %s335
      %s337 = smul.u32 8, %s21
      %s338 = smul.u32 8, %s21
      %p339 = scmp.lt.s32.totalorder %s20, 1
      %s340 = scalar_select %p339, %s20, 1
      %p341 = scmp.lt.s32.totalorder %s338, 7
      %s342 = scalar_select %p341, %s338, 7
      %s343 = smul.addr %s340, 8
      %s344 = sadd.s32 %s342, %s343
      %s345 = smul.addr %s344, 4
      %s346 = scalar_lea.vmem %s2, %s345
      %s347 = smul.u32 8, %s21
      %p348 = scmp.lt.s32.totalorder %s20, 1
      %s349 = scalar_select %p348, %s20, 1
      %s350 = scalar_lea.vmem %s3, %s349
      %p351 = scmp.lt.s32.totalorder %s20, 1
      %s352 = scalar_select %p351, %s20, 1
      %s353 = scalar_lea.vmem %s4, %s352
      %s354 = smul.u32 8, %s21
      %p355 = scmp.lt.s32.totalorder %s20, 1
      %s356 = scalar_select %p355, %s20, 1
      %p357 = scmp.lt.s32.totalorder %s354, 7
      %s358 = scalar_select %p357, %s354, 7
      %s359 = smul.addr %s356, 8
      %s360 = sadd.s32 %s358, %s359
      %s361 = smul.addr %s360, 8
      %s362 = scalar_lea.vmem %s5, %s361
      %s363 = smul.u32 8, %s21
      %v364 = vld [vmem:[%s326] sm:$0xf]
      %v365 = vld [vmem:[%s326 + $0x4] sm:$0xf]
      %v366 = vld [vmem:[%s326 + $0x8] sm:$0xf]
      %v367 = vld [vmem:[%s326 + $0xc] sm:$0xf]
      %v368 = vld [vmem:[%s326 + $0x10] sm:$0xf]
      %v369 = vld [vmem:[%s326 + $0x14] sm:$0xf]
      %v370 = vld [vmem:[%s326 + $0x18] sm:$0xf]
      %v371 = vld [vmem:[%s326 + $0x1c] sm:$0xf]
      %v372 = vunpack.c.l.bf16 %v364
      %v373 = vunpack.c.l.bf16 %v365
      %v374 = vunpack.c.l.bf16 %v366
      %v375 = vunpack.c.l.bf16 %v367
      %v376 = vunpack.c.l.bf16 %v368
      %v377 = vunpack.c.l.bf16 %v369
      %v378 = vunpack.c.l.bf16 %v370
      %v379 = vunpack.c.l.bf16 %v371
      %v380 = vld [vmem:[%s336] sm:$0xf]
      %v381 = vld [vmem:[%s336 + $0x4] sm:$0xf]
      %v382 = vld [vmem:[%s336 + $0x8] sm:$0xf]
      %v383 = vld [vmem:[%s336 + $0xc] sm:$0xf]
      %v384 = vld [vmem:[%s336 + $0x10] sm:$0xf]
      %v385 = vld [vmem:[%s336 + $0x14] sm:$0xf]
      %v386 = vld [vmem:[%s336 + $0x18] sm:$0xf]
      %v387 = vld [vmem:[%s336 + $0x1c] sm:$0xf]
      %v388 = vunpack.c.l.bf16 %v380
      %v389 = vunpack.c.l.bf16 %v381
      %v390 = vunpack.c.l.bf16 %v382
      %v391 = vunpack.c.l.bf16 %v383
      %v392 = vunpack.c.l.bf16 %v384
      %v393 = vunpack.c.l.bf16 %v385
      %v394 = vunpack.c.l.bf16 %v386
      %v395 = vunpack.c.l.bf16 %v387
      %v396 = vld [vmem:[%s350] sm:$0x1]
      %v398 = vperm.slane %v396, 0
      %v400 = vmul.f32 %v388, %v398
      %v401 = vmul.f32 %v389, %v398
      %v402 = vmul.f32 %v390, %v398
      %v403 = vmul.f32 %v391, %v398
      %v404 = vmul.f32 %v392, %v398
      %v405 = vmul.f32 %v393, %v398
      %v406 = vmul.f32 %v394, %v398
      %v407 = vmul.f32 %v395, %v398
      %v408 = vld [vmem:[%s346] sm:$0xf]
      %v409 = vld [vmem:[%s346 + $0x4] sm:$0xf]
      %v410 = vld [vmem:[%s346 + $0x8] sm:$0xf]
      %v411 = vld [vmem:[%s346 + $0xc] sm:$0xf]
      %v412 = vld [vmem:[%s346 + $0x10] sm:$0xf]
      %v413 = vld [vmem:[%s346 + $0x14] sm:$0xf]
      %v414 = vld [vmem:[%s346 + $0x18] sm:$0xf]
      %v415 = vld [vmem:[%s346 + $0x1c] sm:$0xf]
      %v416 = vunpack.c.l.bf16 %v408
      %v417 = vunpack.c.l.bf16 %v409
      %v418 = vunpack.c.l.bf16 %v410
      %v419 = vunpack.c.l.bf16 %v411
      %v420 = vunpack.c.l.bf16 %v412
      %v421 = vunpack.c.l.bf16 %v413
      %v422 = vunpack.c.l.bf16 %v414
      %v423 = vunpack.c.l.bf16 %v415
      %v424 = vld [vmem:[%s353] sm:$0x1]
      %v426 = vperm.slane %v424, 0
      %v428 = vmul.f32 %v416, %v426
      %v429 = vmul.f32 %v417, %v426
      %v430 = vmul.f32 %v418, %v426
      %v431 = vmul.f32 %v419, %v426
      %v432 = vmul.f32 %v420, %v426
      %v433 = vmul.f32 %v421, %v426
      %v434 = vmul.f32 %v422, %v426
      %v435 = vmul.f32 %v423, %v426
      %v436 = vadd.f32 %v400, %v428
      %v437 = vadd.f32 %v401, %v429
      %v438 = vadd.f32 %v402, %v430
      %v439 = vadd.f32 %v403, %v431
      %v440 = vadd.f32 %v404, %v432
      %v441 = vadd.f32 %v405, %v433
      %v442 = vadd.f32 %v406, %v434
      %v443 = vadd.f32 %v407, %v435
      %v444 = vmul.f32 %v436, 0.5
      %v445 = vmul.f32 %v437, 0.5
      %v446 = vmul.f32 %v438, 0.5
      %v447 = vmul.f32 %v439, 0.5
      %v448 = vmul.f32 %v440, 0.5
      %v449 = vmul.f32 %v441, 0.5
      %v450 = vmul.f32 %v442, 0.5
      %v451 = vmul.f32 %v443, 0.5
      %v452 = vadd.f32 %v372, %v444
      %v453 = vadd.f32 %v373, %v445
      %v454 = vadd.f32 %v374, %v446
      %v455 = vadd.f32 %v375, %v447
      %v456 = vadd.f32 %v376, %v448
      %v457 = vadd.f32 %v377, %v449
      %v458 = vadd.f32 %v378, %v450
      %v459 = vadd.f32 %v379, %v451
      %vm460 = vcmask 64512
      %461 = vst.msk [vmem:[%s362] sm:$0xff] %vm460, %v452
      %462 = vst.msk [vmem:[%s362 + $0x8] sm:$0xff] %vm460, %v453
      %463 = vst.msk [vmem:[%s362 + $0x10] sm:$0xff] %vm460, %v454
      %464 = vst.msk [vmem:[%s362 + $0x18] sm:$0xff] %vm460, %v455
      %465 = vst.msk [vmem:[%s362 + $0x20] sm:$0xff] %vm460, %v456
      %466 = vst.msk [vmem:[%s362 + $0x28] sm:$0xff] %vm460, %v457
      %467 = vst.msk [vmem:[%s362 + $0x30] sm:$0xff] %vm460, %v458
      %468 = vst.msk [vmem:[%s362 + $0x38] sm:$0xff] %vm460, %v459
      %s469 = smul.u32 8, %s21
      %p470 = scmp.lt.s32.totalorder %s20, 1
      %s471 = scalar_select %p470, %s20, 1
      %p472 = scmp.lt.s32.totalorder %s469, 7
      %s473 = scalar_select %p472, %s469, 7
      %s474 = smul.addr %s471, 8
      %s475 = sadd.s32 %s473, %s474
      %s476 = smul.addr %s475, 8
      %s477 = scalar_lea.vmem %s5, %s476
      // Predicated region
      $region41: #{basic_block_forward.15} parent=39 // pred_check
        %p478 = pneg %p184
      $region42: #{basic_block_forward.15} parent=39 // pred_check_branch
        %480 = sbr.rel (%p478) target = $region44
      $region43: #{basic_block_forward.15} parent=39 // pred_region
        %s481 = smul.u32 8, %s21
      $region44: #{basic_block_forward.15} parent=39 // pred_fallthru
        _
    $region40: #{basic_block_forward.15} parent=5 // pred_fallthru
      _
    %p482 = scmp.le.s32.totalorder 2, %s11
    // Predicated region
    $region45: #{basic_block_forward.15} parent=5 // pred_check
      %p483 = pneg %p482
    $region46: #{basic_block_forward.15} parent=5 // pred_check_branch
      %485 = sbr.rel (%p483) target = $region48
    $region47: #{basic_block_forward.15} parent=5 // pred_region
      %s486 = ssub.s32 %s11, 2
      // Predicated region
      $region49: #{basic_block_forward.15} parent=47 // pred_check
        %p487 = pneg %p190
      $region50: #{basic_block_forward.15} parent=47 // pred_check_branch
        %489 = sbr.rel (%p487) target = $region52
      $region51: #{basic_block_forward.15} parent=47 // pred_region
        %s490 = smul.u32 8, %s23
        %p491 = scmp.lt.s32.totalorder %s22, 1
        %s492 = scalar_select %p491, %s22, 1
        %p493 = scmp.lt.s32.totalorder %s490, 7
        %s494 = scalar_select %p493, %s490, 7
        %s495 = smul.addr %s492, 8
        %s496 = sadd.s32 %s494, %s495
        %s497 = smul.addr %s496, 8
        %s498 = scalar_lea.vmem %s5, %s497
      $region52: #{basic_block_forward.15} parent=47 // pred_fallthru
        _
    $region48: #{basic_block_forward.15} parent=5 // pred_fallthru
      _
  $region6: #{basic_block_forward.15} parent=0 // loop_footer
    %s15 = sadd.s32 1, %s11
  $region7: #{basic_block_forward.15} parent=0 // loop_footer_branch
    %10 = sbr.rel target = $region3
  $region8: #{basic_block_forward.15} parent=0 // loop_exit
    _

// kernel: basic_block_forward.14
$region0: #{basic_block_forward.14}
  #allocation0 [shape = 'u32[]', space=smem, size = 0x4, offset = 0x4, fixed_abs, tag = 'smem constant byte address 0x4 - core index']
  #allocation1 [shape = 'u32[72,128]{1,0:T(1,128)}', space=vmem, size = 0x9000, scoped, tag = 'internal scratch']
  %s0 = inlined_call_operand.vmem [shape: bf16[128,4], index: 0, kind: input, shape index: {}]
  %s1 = inlined_call_operand.vmem [shape: bf16[4,4], index: 1, kind: input, shape index: {}]
  %s2 = inlined_call_operand.vmem [shape: f32[1,4], index: 2, kind: input, shape index: {}]
  %s3 = inlined_call_operand.vmem [shape: f32[1,4], index: 3, kind: input, shape index: {}]
  %s4 = inlined_call_operand.vmem [shape: bf16[128,4], index: 4, kind: output, shape index: {}]
  %s5 = sld [smem:[#allocation0]]
  $region26: #{basic_block_forward.14} parent=0
    _
  %s7 = ssub.s32 1, %s5
  %s8 = scalar_select 0, %s7, %s5
  // Predicated region
  $region2: #{basic_block_forward.14} parent=0 // pred_check
    _
  $region3: #{basic_block_forward.14} parent=0 // pred_check_branch
    %10 = sbr.rel (0) target = $region5
  $region4: #{basic_block_forward.14} parent=0 // pred_region
    _
  $region5: #{basic_block_forward.14} parent=0 // pred_fallthru
    _
  // Predicated region
  $region6: #{basic_block_forward.14} parent=0 // pred_check
    _
  $region7: #{basic_block_forward.14} parent=0 // pred_check_branch
    %12 = sbr.rel (0) target = $region9
  $region8: #{basic_block_forward.14} parent=0 // pred_region
    _
  $region9: #{basic_block_forward.14} parent=0 // pred_fallthru
    _
  // Predicated region
  $region10: #{basic_block_forward.14} parent=0 // pred_check
    _
  $region11: #{basic_block_forward.14} parent=0 // pred_check_branch
    %14 = sbr.rel (0) target = $region13
  $region12: #{basic_block_forward.14} parent=0 // pred_region
    _
  $region13: #{basic_block_forward.14} parent=0 // pred_fallthru
    _
  // Predicated region
  $region14: #{basic_block_forward.14} parent=0 // pred_check
    _
  $region15: #{basic_block_forward.14} parent=0 // pred_check_branch
    %16 = sbr.rel (0) target = $region17
  $region16: #{basic_block_forward.14} parent=0 // pred_region
    _
  $region17: #{basic_block_forward.14} parent=0 // pred_fallthru
    _
  %v18 = vld [vmem:[%s0] sm:$0xf]
  %v19 = vld [vmem:[%s0 + $0x4] sm:$0xf]
  %v20 = vld [vmem:[%s0 + $0x8] sm:$0xf]
  %v21 = vld [vmem:[%s0 + $0xc] sm:$0xf]
  %v22 = vld [vmem:[%s0 + $0x10] sm:$0xf]
  %v23 = vld [vmem:[%s0 + $0x14] sm:$0xf]
  %v24 = vld [vmem:[%s0 + $0x18] sm:$0xf]
  %v25 = vld [vmem:[%s0 + $0x1c] sm:$0xf]
  %v26 = vld [vmem:[%s0 + $0x20] sm:$0xf]
  %v27 = vld [vmem:[%s0 + $0x24] sm:$0xf]
  %v28 = vld [vmem:[%s0 + $0x28] sm:$0xf]
  %v29 = vld [vmem:[%s0 + $0x2c] sm:$0xf]
  %v30 = vld [vmem:[%s0 + $0x30] sm:$0xf]
  %v31 = vld [vmem:[%s0 + $0x34] sm:$0xf]
  %v32 = vld [vmem:[%s0 + $0x38] sm:$0xf]
  %v33 = vld [vmem:[%s0 + $0x3c] sm:$0xf]
  %v34 = vunpack.c.l.bf16 %v18
  %v35 = vunpack.c.l.bf16 %v19
  %v36 = vunpack.c.l.bf16 %v20
  %v37 = vunpack.c.l.bf16 %v21
  %v38 = vunpack.c.l.bf16 %v22
  %v39 = vunpack.c.l.bf16 %v23
  %v40 = vunpack.c.l.bf16 %v24
  %v41 = vunpack.c.l.bf16 %v25
  %v42 = vunpack.c.l.bf16 %v26
  %v43 = vunpack.c.l.bf16 %v27
  %v44 = vunpack.c.l.bf16 %v28
  %v45 = vunpack.c.l.bf16 %v29
  %v46 = vunpack.c.l.bf16 %v30
  %v47 = vunpack.c.l.bf16 %v31
  %v48 = vunpack.c.l.bf16 %v32
  %v49 = vunpack.c.l.bf16 %v33
  %v50 = vmax.f32 %v34, 0.0
  %v51 = vmax.f32 %v35, 0.0
  %v52 = vmax.f32 %v36, 0.0
  %v53 = vmax.f32 %v37, 0.0
  %v54 = vmax.f32 %v38, 0.0
  %v55 = vmax.f32 %v39, 0.0
  %v56 = vmax.f32 %v40, 0.0
  %v57 = vmax.f32 %v41, 0.0
  %v58 = vmax.f32 %v42, 0.0
  %v59 = vmax.f32 %v43, 0.0
  %v60 = vmax.f32 %v44, 0.0
  %v61 = vmax.f32 %v45, 0.0
  %v62 = vmax.f32 %v46, 0.0
  %v63 = vmax.f32 %v47, 0.0
  %v64 = vmax.f32 %v48, 0.0
  %v65 = vmax.f32 %v49, 0.0
  %v66 = vpack.c.bf16 %v51, %v50
  %v67 = vpack.c.bf16 %v53, %v52
  %v68 = vpack.c.bf16 %v55, %v54
  %v69 = vpack.c.bf16 %v57, %v56
  %v70 = vpack.c.bf16 %v59, %v58
  %v71 = vpack.c.bf16 %v61, %v60
  %v72 = vpack.c.bf16 %v63, %v62
  %v73 = vpack.c.bf16 %v65, %v64
  %v74 = vld [vmem:[%s1] sm:$0x3]
  %vm75 = vcmask 31744
  %v77 = vsel %vm75, %v66, 0
  %v80 = vsel %vm75, %v67, 0
  %v83 = vsel %vm75, %v68, 0
  %v86 = vsel %vm75, %v69, 0
  %v89 = vsel %vm75, %v70, 0
  %v92 = vsel %vm75, %v71, 0
  %v95 = vsel %vm75, %v72, 0
  %v98 = vsel %vm75, %v73, 0
  %vm100 = vcmask 1041408
  %v102 = vsel %vm100, %v74, 0
  %104 = vmatpush.bf16.msra.mxu0 0
  %105 = vmatpush.bf16.msra.mxu0 0
  %106 = vmatpush.bf16.msra.mxu0 0
  %107 = vmatpush.bf16.msra.mxu0 0
  %108 = vmatpush.bf16.msra.mxu0 0
  %109 = vmatpush.bf16.msra.mxu0 0
  %110 = vmatpush.bf16.msra.mxu0 0
  %111 = vmatpush.bf16.msra.mxu0 %v102
  %112 = vmatmul.bf16.gmra.mxu0 %v77
  %v113 = vpop.f32.mrf.mxu0
  %v114 = vadd.f32 0.0, %v113
  %v115 = vpop.f32.mrf.mxu0
  %v116 = vadd.f32 0.0, %v115
  %117 = vmatmul.bf16.gmra.mxu0 %v80
  %v118 = vpop.f32.mrf.mxu0
  %v119 = vadd.f32 0.0, %v118
  %v120 = vpop.f32.mrf.mxu0
  %v121 = vadd.f32 0.0, %v120
  %122 = vmatmul.bf16.gmra.mxu0 %v83
  %v123 = vpop.f32.mrf.mxu0
  %v124 = vadd.f32 0.0, %v123
  %v125 = vpop.f32.mrf.mxu0
  %v126 = vadd.f32 0.0, %v125
  %127 = vmatmul.bf16.gmra.mxu0 %v86
  %v128 = vpop.f32.mrf.mxu0
  %v129 = vadd.f32 0.0, %v128
  %v130 = vpop.f32.mrf.mxu0
  %v131 = vadd.f32 0.0, %v130
  %132 = vmatmul.bf16.gmra.mxu0 %v89
  %v133 = vpop.f32.mrf.mxu0
  %v134 = vadd.f32 0.0, %v133
  %v135 = vpop.f32.mrf.mxu0
  %v136 = vadd.f32 0.0, %v135
  %137 = vmatmul.bf16.gmra.mxu0 %v92
  %v138 = vpop.f32.mrf.mxu0
  %v139 = vadd.f32 0.0, %v138
  %v140 = vpop.f32.mrf.mxu0
  %v141 = vadd.f32 0.0, %v140
  %142 = vmatmul.bf16.gmra.mxu0 %v95
  %v143 = vpop.f32.mrf.mxu0
  %v144 = vadd.f32 0.0, %v143
  %v145 = vpop.f32.mrf.mxu0
  %v146 = vadd.f32 0.0, %v145
  %147 = vmatmul.bf16.gmra.mxu0 %v98
  %v148 = vpop.f32.mrf.mxu0
  %v149 = vadd.f32 0.0, %v148
  %v150 = vpop.f32.mrf.mxu0
  %v151 = vadd.f32 0.0, %v150
  %152 = vdwg.mxu0
  %v153 = vld [vmem:[%s2] sm:$0x1]
  %v155 = vperm.slane %v153, 0
  %v157 = vmul.f32 %v114, %v155
  %v158 = vmul.f32 %v116, %v155
  %v159 = vmul.f32 %v119, %v155
  %v160 = vmul.f32 %v121, %v155
  %v161 = vmul.f32 %v124, %v155
  %v162 = vmul.f32 %v126, %v155
  %v163 = vmul.f32 %v129, %v155
  %v164 = vmul.f32 %v131, %v155
  %v165 = vmul.f32 %v134, %v155
  %v166 = vmul.f32 %v136, %v155
  %v167 = vmul.f32 %v139, %v155
  %v168 = vmul.f32 %v141, %v155
  %v169 = vmul.f32 %v144, %v155
  %v170 = vmul.f32 %v146, %v155
  %v171 = vmul.f32 %v149, %v155
  %v172 = vmul.f32 %v151, %v155
  %v173 = vld [vmem:[%s3] sm:$0x1]
  %v175 = vperm.slane %v173, 0
  %v177 = vadd.f32 %v157, %v175
  %v178 = vadd.f32 %v158, %v175
  %v179 = vadd.f32 %v159, %v175
  %v180 = vadd.f32 %v160, %v175
  %v181 = vadd.f32 %v161, %v175
  %v182 = vadd.f32 %v162, %v175
  %v183 = vadd.f32 %v163, %v175
  %v184 = vadd.f32 %v164, %v175
  %v185 = vadd.f32 %v165, %v175
  %v186 = vadd.f32 %v166, %v175
  %v187 = vadd.f32 %v167, %v175
  %v188 = vadd.f32 %v168, %v175
  %v189 = vadd.f32 %v169, %v175
  %v190 = vadd.f32 %v170, %v175
  %v191 = vadd.f32 %v171, %v175
  %v192 = vadd.f32 %v172, %v175
  %v193 = vpack.c.bf16 %v177, %v177
  %v194 = vpack.c.bf16 %v178, %v178
  %v195 = vpack.c.bf16 %v179, %v179
  %v196 = vpack.c.bf16 %v180, %v180
  %v197 = vpack.c.bf16 %v181, %v181
  %v198 = vpack.c.bf16 %v182, %v182
  %v199 = vpack.c.bf16 %v183, %v183
  %v200 = vpack.c.bf16 %v184, %v184
  %v201 = vpack.c.bf16 %v185, %v185
  %v202 = vpack.c.bf16 %v186, %v186
  %v203 = vpack.c.bf16 %v187, %v187
  %v204 = vpack.c.bf16 %v188, %v188
  %v205 = vpack.c.bf16 %v189, %v189
  %v206 = vpack.c.bf16 %v190, %v190
  %v207 = vpack.c.bf16 %v191, %v191
  %v208 = vpack.c.bf16 %v192, %v192
  %vm209 = vcmask 27648
  %210 = vst.msk [vmem:[%s4] sm:$0xf] %vm209, %v193
  %211 = vst.msk [vmem:[%s4 + $0x4] sm:$0xf] %vm209, %v194
  %212 = vst.msk [vmem:[%s4 + $0x8] sm:$0xf] %vm209, %v195
  %213 = vst.msk [vmem:[%s4 + $0xc] sm:$0xf] %vm209, %v196
  %214 = vst.msk [vmem:[%s4 + $0x10] sm:$0xf] %vm209, %v197
  %215 = vst.msk [vmem:[%s4 + $0x14] sm:$0xf] %vm209, %v198
  %216 = vst.msk [vmem:[%s4 + $0x18] sm:$0xf] %vm209, %v199
  %217 = vst.msk [vmem:[%s4 + $0x1c] sm:$0xf] %vm209, %v200
  %218 = vst.msk [vmem:[%s4 + $0x20] sm:$0xf] %vm209, %v201
  %219 = vst.msk [vmem:[%s4 + $0x24] sm:$0xf] %vm209, %v202
  %220 = vst.msk [vmem:[%s4 + $0x28] sm:$0xf] %vm209, %v203
  %221 = vst.msk [vmem:[%s4 + $0x2c] sm:$0xf] %vm209, %v204
  %222 = vst.msk [vmem:[%s4 + $0x30] sm:$0xf] %vm209, %v205
  %223 = vst.msk [vmem:[%s4 + $0x34] sm:$0xf] %vm209, %v206
  %224 = vst.msk [vmem:[%s4 + $0x38] sm:$0xf] %vm209, %v207
  %225 = vst.msk [vmem:[%s4 + $0x3c] sm:$0xf] %vm209, %v208
  // Predicated region
  $region18: #{basic_block_forward.14} parent=0 // pred_check
    _
  $region19: #{basic_block_forward.14} parent=0 // pred_check_branch
    %227 = sbr.rel (0) target = $region21
  $region20: #{basic_block_forward.14} parent=0 // pred_region
    _
  $region21: #{basic_block_forward.14} parent=0 // pred_fallthru
    _
  // Predicated region
  $region22: #{basic_block_forward.14} parent=0 // pred_check
    _
  $region23: #{basic_block_forward.14} parent=0 // pred_check_branch
    %229 = sbr.rel (0) target = $region25
  $region24: #{basic_block_forward.14} parent=0 // pred_region
    _
  $region25: #{basic_block_forward.14} parent=0 // pred_fallthru
    _

</llo_original>
